<compile_context>
chip_gen: v5e
topology: v5e:2x2
jax: 0.10.0
libtpu: 0.0.40
codegen_flags: <defaults>
</compile_context>

<pallas_src>
import numpy as np
import jax
import jax.numpy as jnp
from jax import lax
from jax.experimental import pallas as pl
from jax.experimental.pallas import tpu as pltpu

KSIZE = 7
DILATION = 1
PAD = int(DILATION * (KSIZE - 1) // 2)  # = 3 (kernel assumes DILATION == 1)
WS_EPS = 1e-5


def nf_spatial_block_pallas(x, weight, bias):
    """x: (N, C, H, W); weight: (1, 2, K, K) f32; bias: (1,) f32."""
    N, C, H, W = x.shape
    HW = H * W
    M = PAD * W + PAD               # largest flat-index reach of a (dh, dw) shift
    out_dtype = x.dtype
    native_bf16 = np.dtype(out_dtype) == np.dtype(jnp.bfloat16)

    # --- parameter glue: weight standardization (classic WS, ddof=0) ---
    mean = jnp.mean(weight, axis=(1, 2, 3), keepdims=True)
    var = jnp.var(weight, axis=(1, 2, 3), keepdims=True)
    w_std = (weight - mean) / jnp.sqrt(var + WS_EPS)
    w_flat = w_std.reshape(-1).astype(jnp.float32)              # (2*K*K,) OIHW order
    b = bias.reshape(-1).astype(jnp.float32)                    # (1,)

    x_flat = x.reshape(N, C, HW)                                # free relayout

    # --- channel group size: one sublane tile per grouped read ---
    G = 16 if x.dtype.itemsize < 4 else 8
    G = min(G, C)
    n_full = C // G
    rem = C - n_full * G

    # --- batch block size nb: chip-aware x budget AND f32 working-set cap ---
    try:
        info = pltpu.get_tpu_info()
        vmem_cap = int(getattr(info, "vmem_capacity_bytes", 64 << 20))
    except Exception:
        vmem_cap = 64 << 20
    x_budget = (6 << 20) if vmem_cap >= (128 << 20) else (2 << 20)

    per_elem = C * HW * x.dtype.itemsize
    nb_cap = max(1, x_budget // max(per_elem, 1))
    # (nb, HW) f32 temporaries (cmax/csum/acc/scale) must stay well under the
    # 256 KiB vreg file or the unrolled 49-tap loop becomes spill-bound.
    nb_cap = max(1, min(nb_cap, (128 * 1024) // (HW * 4)))
    if N > 1:
        nb_cap = min(nb_cap, max(1, (N + 1) // 2))   # >=2 grid steps -> both TCs
    nb_cap = min(nb_cap, N)
    nb = 1
    for d in range(1, int(nb_cap) + 1):              # largest divisor of N <= cap
        if N % d == 0:
            nb = d
    grid = N // nb
    # TODO(synk): add an H-tiling grid axis with a 3-row halo for very large
    # C*H*W slabs (v7x: 64 MiB VMEM, 2 TCs) and for the N == 1 case.

    def kernel(w_ref, b_ref, x_ref, o_ref, pad_ref):
        # Zero only the tiny flat-shift margins (2*M lanes per map).  Kept per
        # step (2 tiny masked stores) rather than gated on program_id == 0: with
        # a "parallel" grid axis on a 2-TC chip the second core never sees
        # program_id 0 but owns its own (uninitialized) scratch.
        zeros_m = jnp.zeros((nb, 2, M), jnp.float32)
        pad_ref[:, :, pl.ds(0, M)] = zeros_m
        pad_ref[:, :, pl.ds(M + HW, M)] = zeros_m

        # ---- channel max / mean pool: sublane-dense groups of G channels ----
        def pool_group(carry, c0, g):
            cm_, cs_ = carry
            v = x_ref[:, pl.ds(c0, g), :].astype(jnp.float32)   # (nb, g, HW)
            return (jnp.maximum(cm_, jnp.max(v, axis=1)),
                    cs_ + jnp.sum(v, axis=1))

        v0 = x_ref[:, pl.ds(0, G), :].astype(jnp.float32)
        cmax = jnp.max(v0, axis=1)
        csum = jnp.sum(v0, axis=1)
        if n_full > 1:
            if n_full <= 8:
                for gi in range(1, n_full):
                    cmax, csum = pool_group((cmax, csum), gi * G, G)
            else:
                def pool_body(gi, carry):
                    c0 = pl.multiple_of(gi * G, G)
                    return pool_group(carry, c0, G)
                cmax, csum = lax.fori_loop(1, n_full, pool_body, (cmax, csum),
                                           unroll=2)
        if rem > 0:
            cmax, csum = pool_group((cmax, csum), n_full * G, rem)

        pad_ref[:, 0, pl.ds(M, HW)] = cmax
        pad_ref[:, 1, pl.ds(M, HW)] = csum * (1.0 / C)

        # ---- 7x7 conv (2->1): 49 shifted lane-dense reads of the padded map.
        # kw-outer / kh-inner; the column-validity mask (built in-kernel from an
        # iota, no HBM stream) is applied once per kw to the kh-partial sum.
        # Rows falling outside [0, H) read the zero margins.
        col = lax.broadcasted_iota(jnp.int32, (1, HW), 1) % W
        acc = jnp.zeros((nb, HW), jnp.float32)
        for kw in range(KSIZE):
            dw = kw - PAD
            cmask = ((col + dw >= 0) & (col + dw < W)).astype(jnp.float32)
            part = jnp.zeros((nb, HW), jnp.float32)
            for kh in range(KSIZE):
                dh = kh - PAD
                off = M + dh * W + dw
                s_max = pad_ref[:, 0, pl.ds(off, HW)]
                s_mean = pad_ref[:, 1, pl.ds(off, HW)]
                w_max = w_ref[kh * KSIZE + kw]
                w_mean = w_ref[KSIZE * KSIZE + kh * KSIZE + kw]
                part = part + (w_max * s_max + w_mean * s_mean)
            acc = acc + cmask * part

        # ---- bias -> ReLU -> sigmoid ----
        scale = jax.nn.sigmoid(jnp.maximum(acc + b_ref[0], 0.0))   # (nb, HW) f32

        # ---- x * scale: sublane-dense grouped stores in x's native dtype ----
        if native_bf16:
            scale_b = scale.astype(out_dtype)[:, None, :]          # (nb, 1, HW)

            def mul_group(c0, g):
                o_ref[:, pl.ds(c0, g), :] = x_ref[:, pl.ds(c0, g), :] * scale_b
        else:
            scale_b = scale[:, None, :]

            def mul_group(c0, g):
                xv = x_ref[:, pl.ds(c0, g), :].astype(jnp.float32)
                o_ref[:, pl.ds(c0, g), :] = (xv * scale_b).astype(out_dtype)

        if n_full <= 8:
            for gi in range(n_full):
                mul_group(gi * G, G)
        else:
            def mul_body(gi, _):
                mul_group(pl.multiple_of(gi * G, G), G)
                return 0
            lax.fori_loop(0, n_full, mul_body, 0, unroll=2)
        if rem > 0:
            mul_group(n_full * G, rem)

    grid_spec = pltpu.PrefetchScalarGridSpec(
        num_scalar_prefetch=0,
        grid=(grid,),
        in_specs=[
            pl.BlockSpec(memory_space=pltpu.MemorySpace.SMEM),   # w_flat (98,)
            pl.BlockSpec(memory_space=pltpu.MemorySpace.SMEM),   # bias (1,)
            pl.BlockSpec((nb, C, HW), lambda n: (n, 0, 0)),      # x, native dtype
        ],
        out_specs=pl.BlockSpec((nb, C, HW), lambda n: (n, 0, 0)),
        scratch_shapes=[pltpu.VMEM((nb, 2, HW + 2 * M), jnp.float32)],
    )

    blk_bytes = nb * C * HW * x.dtype.itemsize
    scratch_bytes = nb * 2 * (HW + 2 * M) * 4
    needed = 4 * blk_bytes + scratch_bytes + (4 << 20)
    vmem_limit = int(max(32 << 20, min(needed, 96 << 20, (vmem_cap // 4) * 3)))

    out_flat = pl.pallas_call(
        kernel,
        out_shape=jax.ShapeDtypeStruct((N, C, HW), out_dtype),
        grid_spec=grid_spec,
        input_output_aliases={2: 0},     # output reuses x_flat's HBM buffer
        compiler_params=pltpu.CompilerParams(
            dimension_semantics=("parallel",),
            vmem_limit_bytes=vmem_limit,
        ),
    )(w_flat, b, x_flat)

    return out_flat.reshape(N, C, H, W)


def _reference(x, weight, bias):
    mean = jnp.mean(weight, axis=(1, 2, 3), keepdims=True)
    var = jnp.var(weight, axis=(1, 2, 3), keepdims=True)
    w_std = (weight - mean) / jnp.sqrt(var + WS_EPS)
    cmax = jnp.max(x, axis=1, keepdims=True)
    cmean = jnp.mean(x, axis=1, keepdims=True)
    xc = jnp.concatenate([cmax, cmean], axis=1)  # (N, 2, H, W)
    y = jax.lax.conv_general_dilated(
        xc, w_std, window_strides=(1, 1),
        padding=[(PAD, PAD), (PAD, PAD)],
        dimension_numbers=("NCHW", "OIHW", "NCHW"),
    )
    y = y + bias.reshape(1, -1, 1, 1)
    y = jnp.maximum(y, 0.0)
    return x * jax.nn.sigmoid(y)


if __name__ == "__main__":
    key = jax.random.PRNGKey(0)
    k_x, k_w, k_b = jax.random.split(key, 3)

    N, C, H, W = 2, 4, 16, 16
    x = jax.random.normal(k_x, (N, C, H, W), dtype=jnp.float32)
    # Deterministic synthetic parameters (Conv2d(2 -> 1, 7x7) with bias)
    weight = 0.1 * jax.random.normal(k_w, (1, 2, KSIZE, KSIZE), dtype=jnp.float32)
    bias = 0.1 * jax.random.normal(k_b, (1,), dtype=jnp.float32)

    # Reference computed first (kernel output aliases its input buffer).
    ref = jax.block_until_ready(_reference(x, weight, bias))

    out = nf_spatial_block_pallas(x, weight, bias)
    out = jax.block_until_ready(out)

    assert out.shape == (N, C, H, W)
    assert jnp.allclose(out, ref, rtol=1e-4, atol=2e-5), "mismatch vs reference"

    print("KERNEL_OK")
</pallas_src>

<mosaic_0001>
module attributes {stable_mosaic.version = 11 : i64} {
  func.func @kernel(%arg0: i32, %arg1: memref<98xf32, #tpu.memory_space<smem>>, %arg2: memref<1xf32, #tpu.memory_space<smem>>, %arg3: memref<1x4x256xf32, #tpu.memory_space<vmem>>, %arg4: memref<1x4x256xf32, #tpu.memory_space<vmem>>, %arg5: memref<1x2x358xf32, #tpu.memory_space<vmem>>) attributes {dimension_semantics = [#tpu.dimension_semantics<parallel>], iteration_bounds = array<i64: 2>, scalar_prefetch = 0 : i64, scratch_operands = 1 : i64, tpu.core_type = #tpu.core_type<tc>, window_params = [{transform_indices = @transform_0, window_bounds = array<i64: 98>}, {transform_indices = @transform_1, window_bounds = array<i64: 1>}, {transform_indices = @transform_2, window_bounds = array<i64: 1, 4, 256>}, {transform_indices = @transform_3, window_bounds = array<i64: 1, 4, 256>}]} {
    %cst = arith.constant 0.000000e+00 : f32
    %0 = vector.broadcast %cst : f32 to vector<1x2x51xf32>
    %c0 = arith.constant 0 : index
    %c0_0 = arith.constant 0 : index
    %c0_1 = arith.constant 0 : index
    %1 = vector.load %arg5[%c0, %c0_0, %c0_1] : memref<1x2x358xf32, #tpu.memory_space<vmem>>, vector<1x2x51xf32>
    tpu.vector_store %arg5[%c0, %c0_0, %c0_1], %0 {strides = array<i32>} : memref<1x2x358xf32, #tpu.memory_space<vmem>>, vector<1x2x51xf32>,
    %c0_2 = arith.constant 0 : index
    %c0_3 = arith.constant 0 : index
    %c307 = arith.constant 307 : index
    %2 = vector.load %arg5[%c0_2, %c0_3, %c307] : memref<1x2x358xf32, #tpu.memory_space<vmem>>, vector<1x2x51xf32>
    tpu.vector_store %arg5[%c0_2, %c0_3, %c307], %0 {strides = array<i32>} : memref<1x2x358xf32, #tpu.memory_space<vmem>>, vector<1x2x51xf32>,
    %c0_4 = arith.constant 0 : index
    %c0_5 = arith.constant 0 : index
    %c0_6 = arith.constant 0 : index
    %3 = vector.load %arg3[%c0_4, %c0_5, %c0_6] : memref<1x4x256xf32, #tpu.memory_space<vmem>>, vector<1x4x256xf32>
    %cst_7 = arith.constant dense<0xFF800000> : vector<1x256xf32>
    %4 = vector.multi_reduction <maximumf>, %3, %cst_7 [1] : vector<1x4x256xf32> to vector<1x256xf32>
    %cst_8 = arith.constant dense<0.000000e+00> : vector<1x256xf32>
    %5 = vector.multi_reduction <add>, %3, %cst_8 [1] : vector<1x4x256xf32> to vector<1x256xf32>
    %c0_9 = arith.constant 0 : index
    %c0_10 = arith.constant 0 : index
    %c51 = arith.constant 51 : index
    %6 = vector.load %arg5[%c0_9, %c0_10, %c51] : memref<1x2x358xf32, #tpu.memory_space<vmem>>, vector<1x1x256xf32>
    %7 = vector.shape_cast %6 : vector<1x1x256xf32> to vector<1x256xf32>
    %8 = vector.shape_cast %4 : vector<1x256xf32> to vector<1x1x256xf32>
    tpu.vector_store %arg5[%c0_9, %c0_10, %c51], %8 {strides = array<i32>} : memref<1x2x358xf32, #tpu.memory_space<vmem>>, vector<1x1x256xf32>,
    %cst_11 = arith.constant 2.500000e-01 : f32
    %9 = vector.broadcast %cst_11 : f32 to vector<1x256xf32>
    %10 = arith.mulf %5, %9 : vector<1x256xf32>
    %c0_12 = arith.constant 0 : index
    %c1 = arith.constant 1 : index
    %c51_13 = arith.constant 51 : index
    %11 = vector.load %arg5[%c0_12, %c1, %c51_13] : memref<1x2x358xf32, #tpu.memory_space<vmem>>, vector<1x1x256xf32>
    %12 = vector.shape_cast %11 : vector<1x1x256xf32> to vector<1x256xf32>
    %13 = vector.shape_cast %10 : vector<1x256xf32> to vector<1x1x256xf32>
    tpu.vector_store %arg5[%c0_12, %c1, %c51_13], %13 {strides = array<i32>} : memref<1x2x358xf32, #tpu.memory_space<vmem>>, vector<1x1x256xf32>,
    %14 = tpu.iota {dimensions = array<i32: 1>} : vector<1x256xi32>
    %c16_i32 = arith.constant 16 : i32
    %c0_i32 = arith.constant 0 : i32
    %15 = arith.cmpi eq, %c16_i32, %c0_i32 : i32
    %c1_i32 = arith.constant 1 : i32
    %16 = arith.select %15, %c1_i32, %c16_i32 : i32
    %17 = vector.broadcast %16 : i32 to vector<1x256xi32>
    %18 = arith.remsi %14, %17 : vector<1x256xi32>
    %c0_i32_14 = arith.constant 0 : i32
    %19 = vector.broadcast %c0_i32_14 : i32 to vector<1x256xi32>
    %20 = arith.cmpi ne, %18, %19 : vector<1x256xi32>
    %c0_i32_15 = arith.constant 0 : i32
    %21 = vector.broadcast %c0_i32_15 : i32 to vector<1x256xi32>
    %22 = arith.cmpi slt, %18, %21 : vector<1x256xi32>
    %c0_i32_16 = arith.constant 0 : i32
    %23 = arith.cmpi slt, %16, %c0_i32_16 : i32
    %24 = vector.broadcast %23 : i1 to vector<1x256xi1>
    %25 = vector.broadcast %24 : vector<1x256xi1> to vector<1x256xi1>
    %26 = arith.xori %22, %25 : vector<1x256xi1>
    %27 = arith.andi %26, %20 : vector<1x256xi1>
    %28 = vector.broadcast %16 : i32 to vector<1x256xi32>
    %29 = arith.addi %18, %28 : vector<1x256xi32>
    %30 = arith.select %27, %29, %18 : vector<1x256xi1>, vector<1x256xi32>
    %cst_17 = arith.constant 0.000000e+00 : f32
    %31 = vector.broadcast %cst_17 : f32 to vector<1x256xf32>
    %c-3_i32 = arith.constant -3 : i32
    %32 = vector.broadcast %c-3_i32 : i32 to vector<1x256xi32>
    %33 = arith.addi %30, %32 : vector<1x256xi32>
    %c0_i32_18 = arith.constant 0 : i32
    %34 = vector.broadcast %c0_i32_18 : i32 to vector<1x256xi32>
    %35 = arith.cmpi sge, %33, %34 : vector<1x256xi32>
    %c-3_i32_19 = arith.constant -3 : i32
    %36 = vector.broadcast %c-3_i32_19 : i32 to vector<1x256xi32>
    %37 = arith.addi %30, %36 : vector<1x256xi32>
    %c16_i32_20 = arith.constant 16 : i32
    %38 = vector.broadcast %c16_i32_20 : i32 to vector<1x256xi32>
    %39 = arith.cmpi slt, %37, %38 : vector<1x256xi32>
    %40 = arith.andi %35, %39 : vector<1x256xi1>
    %41 = arith.extui %40 : vector<1x256xi1> to vector<1x256xi32>
    %42 = arith.sitofp %41 : vector<1x256xi32> to vector<1x256xf32>
    %cst_21 = arith.constant 0.000000e+00 : f32
    %43 = vector.broadcast %cst_21 : f32 to vector<1x256xf32>
    %c0_22 = arith.constant 0 : index
    %c0_23 = arith.constant 0 : index
    %c0_24 = arith.constant 0 : index
    %44 = vector.load %arg5[%c0_22, %c0_23, %c0_24] : memref<1x2x358xf32, #tpu.memory_space<vmem>>, vector<1x1x256xf32>
    %45 = vector.shape_cast %44 : vector<1x1x256xf32> to vector<1x256xf32>
    %c0_25 = arith.constant 0 : index
    %c1_26 = arith.constant 1 : index
    %c0_27 = arith.constant 0 : index
    %46 = vector.load %arg5[%c0_25, %c1_26, %c0_27] : memref<1x2x358xf32, #tpu.memory_space<vmem>>, vector<1x1x256xf32>
    %47 = vector.shape_cast %46 : vector<1x1x256xf32> to vector<1x256xf32>
    %c0_28 = arith.constant 0 : index
    %48 = memref.load %arg1[%c0_28] : memref<98xf32, #tpu.memory_space<smem>>
    %c49 = arith.constant 49 : index
    %49 = memref.load %arg1[%c49] : memref<98xf32, #tpu.memory_space<smem>>
    %50 = vector.broadcast %48 : f32 to vector<1x256xf32>
    %51 = arith.mulf %50, %45 : vector<1x256xf32>
    %52 = vector.broadcast %49 : f32 to vector<1x256xf32>
    %53 = arith.mulf %52, %47 : vector<1x256xf32>
    %54 = arith.addf %51, %53 : vector<1x256xf32>
    %55 = arith.addf %43, %54 : vector<1x256xf32>
    %c0_29 = arith.constant 0 : index
    %c0_30 = arith.constant 0 : index
    %c16 = arith.constant 16 : index
    %56 = vector.load %arg5[%c0_29, %c0_30, %c16] : memref<1x2x358xf32, #tpu.memory_space<vmem>>, vector<1x1x256xf32>
    %57 = vector.shape_cast %56 : vector<1x1x256xf32> to vector<1x256xf32>
    %c0_31 = arith.constant 0 : index
    %c1_32 = arith.constant 1 : index
    %c16_33 = arith.constant 16 : index
    %58 = vector.load %arg5[%c0_31, %c1_32, %c16_33] : memref<1x2x358xf32, #tpu.memory_space<vmem>>, vector<1x1x256xf32>
    %59 = vector.shape_cast %58 : vector<1x1x256xf32> to vector<1x256xf32>
    %c7 = arith.constant 7 : index
    %60 = memref.load %arg1[%c7] : memref<98xf32, #tpu.memory_space<smem>>
    %c56 = arith.constant 56 : index
    %61 = memref.load %arg1[%c56] : memref<98xf32, #tpu.memory_space<smem>>
    %62 = vector.broadcast %60 : f32 to vector<1x256xf32>
    %63 = arith.mulf %62, %57 : vector<1x256xf32>
    %64 = vector.broadcast %61 : f32 to vector<1x256xf32>
    %65 = arith.mulf %64, %59 : vector<1x256xf32>
    %66 = arith.addf %63, %65 : vector<1x256xf32>
    %67 = arith.addf %55, %66 : vector<1x256xf32>
    %c0_34 = arith.constant 0 : index
    %c0_35 = arith.constant 0 : index
    %c32 = arith.constant 32 : index
    %68 = vector.load %arg5[%c0_34, %c0_35, %c32] : memref<1x2x358xf32, #tpu.memory_space<vmem>>, vector<1x1x256xf32>
    %69 = vector.shape_cast %68 : vector<1x1x256xf32> to vector<1x256xf32>
    %c0_36 = arith.constant 0 : index
    %c1_37 = arith.constant 1 : index
    %c32_38 = arith.constant 32 : index
    %70 = vector.load %arg5[%c0_36, %c1_37, %c32_38] : memref<1x2x358xf32, #tpu.memory_space<vmem>>, vector<1x1x256xf32>
    %71 = vector.shape_cast %70 : vector<1x1x256xf32> to vector<1x256xf32>
    %c14 = arith.constant 14 : index
    %72 = memref.load %arg1[%c14] : memref<98xf32, #tpu.memory_space<smem>>
    %c63 = arith.constant 63 : index
    %73 = memref.load %arg1[%c63] : memref<98xf32, #tpu.memory_space<smem>>
    %74 = vector.broadcast %72 : f32 to vector<1x256xf32>
    %75 = arith.mulf %74, %69 : vector<1x256xf32>
    %76 = vector.broadcast %73 : f32 to vector<1x256xf32>
    %77 = arith.mulf %76, %71 : vector<1x256xf32>
    %78 = arith.addf %75, %77 : vector<1x256xf32>
    %79 = arith.addf %67, %78 : vector<1x256xf32>
    %c0_39 = arith.constant 0 : index
    %c0_40 = arith.constant 0 : index
    %c48 = arith.constant 48 : index
    %80 = vector.load %arg5[%c0_39, %c0_40, %c48] : memref<1x2x358xf32, #tpu.memory_space<vmem>>, vector<1x1x256xf32>
    %81 = vector.shape_cast %80 : vector<1x1x256xf32> to vector<1x256xf32>
    %c0_41 = arith.constant 0 : index
    %c1_42 = arith.constant 1 : index
    %c48_43 = arith.constant 48 : index
    %82 = vector.load %arg5[%c0_41, %c1_42, %c48_43] : memref<1x2x358xf32, #tpu.memory_space<vmem>>, vector<1x1x256xf32>
    %83 = vector.shape_cast %82 : vector<1x1x256xf32> to vector<1x256xf32>
    %c21 = arith.constant 21 : index
    %84 = memref.load %arg1[%c21] : memref<98xf32, #tpu.memory_space<smem>>
    %c70 = arith.constant 70 : index
    %85 = memref.load %arg1[%c70] : memref<98xf32, #tpu.memory_space<smem>>
    %86 = vector.broadcast %84 : f32 to vector<1x256xf32>
    %87 = arith.mulf %86, %81 : vector<1x256xf32>
    %88 = vector.broadcast %85 : f32 to vector<1x256xf32>
    %89 = arith.mulf %88, %83 : vector<1x256xf32>
    %90 = arith.addf %87, %89 : vector<1x256xf32>
    %91 = arith.addf %79, %90 : vector<1x256xf32>
    %c0_44 = arith.constant 0 : index
    %c0_45 = arith.constant 0 : index
    %c64 = arith.constant 64 : index
    %92 = vector.load %arg5[%c0_44, %c0_45, %c64] : memref<1x2x358xf32, #tpu.memory_space<vmem>>, vector<1x1x256xf32>
    %93 = vector.shape_cast %92 : vector<1x1x256xf32> to vector<1x256xf32>
    %c0_46 = arith.constant 0 : index
    %c1_47 = arith.constant 1 : index
    %c64_48 = arith.constant 64 : index
    %94 = vector.load %arg5[%c0_46, %c1_47, %c64_48] : memref<1x2x358xf32, #tpu.memory_space<vmem>>, vector<1x1x256xf32>
    %95 = vector.shape_cast %94 : vector<1x1x256xf32> to vector<1x256xf32>
    %c28 = arith.constant 28 : index
    %96 = memref.load %arg1[%c28] : memref<98xf32, #tpu.memory_space<smem>>
    %c77 = arith.constant 77 : index
    %97 = memref.load %arg1[%c77] : memref<98xf32, #tpu.memory_space<smem>>
    %98 = vector.broadcast %96 : f32 to vector<1x256xf32>
    %99 = arith.mulf %98, %93 : vector<1x256xf32>
    %100 = vector.broadcast %97 : f32 to vector<1x256xf32>
    %101 = arith.mulf %100, %95 : vector<1x256xf32>
    %102 = arith.addf %99, %101 : vector<1x256xf32>
    %103 = arith.addf %91, %102 : vector<1x256xf32>
    %c0_49 = arith.constant 0 : index
    %c0_50 = arith.constant 0 : index
    %c80 = arith.constant 80 : index
    %104 = vector.load %arg5[%c0_49, %c0_50, %c80] : memref<1x2x358xf32, #tpu.memory_space<vmem>>, vector<1x1x256xf32>
    %105 = vector.shape_cast %104 : vector<1x1x256xf32> to vector<1x256xf32>
    %c0_51 = arith.constant 0 : index
    %c1_52 = arith.constant 1 : index
    %c80_53 = arith.constant 80 : index
    %106 = vector.load %arg5[%c0_51, %c1_52, %c80_53] : memref<1x2x358xf32, #tpu.memory_space<vmem>>, vector<1x1x256xf32>
    %107 = vector.shape_cast %106 : vector<1x1x256xf32> to vector<1x256xf32>
    %c35 = arith.constant 35 : index
    %108 = memref.load %arg1[%c35] : memref<98xf32, #tpu.memory_space<smem>>
    %c84 = arith.constant 84 : index
    %109 = memref.load %arg1[%c84] : memref<98xf32, #tpu.memory_space<smem>>
    %110 = vector.broadcast %108 : f32 to vector<1x256xf32>
    %111 = arith.mulf %110, %105 : vector<1x256xf32>
    %112 = vector.broadcast %109 : f32 to vector<1x256xf32>
    %113 = arith.mulf %112, %107 : vector<1x256xf32>
    %114 = arith.addf %111, %113 : vector<1x256xf32>
    %115 = arith.addf %103, %114 : vector<1x256xf32>
    %c0_54 = arith.constant 0 : index
    %c0_55 = arith.constant 0 : index
    %c96 = arith.constant 96 : index
    %116 = vector.load %arg5[%c0_54, %c0_55, %c96] : memref<1x2x358xf32, #tpu.memory_space<vmem>>, vector<1x1x256xf32>
    %117 = vector.shape_cast %116 : vector<1x1x256xf32> to vector<1x256xf32>
    %c0_56 = arith.constant 0 : index
    %c1_57 = arith.constant 1 : index
    %c96_58 = arith.constant 96 : index
    %118 = vector.load %arg5[%c0_56, %c1_57, %c96_58] : memref<1x2x358xf32, #tpu.memory_space<vmem>>, vector<1x1x256xf32>
    %119 = vector.shape_cast %118 : vector<1x1x256xf32> to vector<1x256xf32>
    %c42 = arith.constant 42 : index
    %120 = memref.load %arg1[%c42] : memref<98xf32, #tpu.memory_space<smem>>
    %c91 = arith.constant 91 : index
    %121 = memref.load %arg1[%c91] : memref<98xf32, #tpu.memory_space<smem>>
    %122 = vector.broadcast %120 : f32 to vector<1x256xf32>
    %123 = arith.mulf %122, %117 : vector<1x256xf32>
    %124 = vector.broadcast %121 : f32 to vector<1x256xf32>
    %125 = arith.mulf %124, %119 : vector<1x256xf32>
    %126 = arith.addf %123, %125 : vector<1x256xf32>
    %127 = arith.addf %115, %126 : vector<1x256xf32>
    %128 = arith.mulf %42, %127 : vector<1x256xf32>
    %129 = arith.addf %31, %128 : vector<1x256xf32>
    %c-2_i32 = arith.constant -2 : i32
    %130 = vector.broadcast %c-2_i32 : i32 to vector<1x256xi32>
    %131 = arith.addi %30, %130 : vector<1x256xi32>
    %c0_i32_59 = arith.constant 0 : i32
    %132 = vector.broadcast %c0_i32_59 : i32 to vector<1x256xi32>
    %133 = arith.cmpi sge, %131, %132 : vector<1x256xi32>
    %c-2_i32_60 = arith.constant -2 : i32
    %134 = vector.broadcast %c-2_i32_60 : i32 to vector<1x256xi32>
    %135 = arith.addi %30, %134 : vector<1x256xi32>
    %c16_i32_61 = arith.constant 16 : i32
    %136 = vector.broadcast %c16_i32_61 : i32 to vector<1x256xi32>
    %137 = arith.cmpi slt, %135, %136 : vector<1x256xi32>
    %138 = arith.andi %133, %137 : vector<1x256xi1>
    %139 = arith.extui %138 : vector<1x256xi1> to vector<1x256xi32>
    %140 = arith.sitofp %139 : vector<1x256xi32> to vector<1x256xf32>
    %cst_62 = arith.constant 0.000000e+00 : f32
    %141 = vector.broadcast %cst_62 : f32 to vector<1x256xf32>
    %c0_63 = arith.constant 0 : index
    %c0_64 = arith.constant 0 : index
    %c1_65 = arith.constant 1 : index
    %142 = vector.load %arg5[%c0_63, %c0_64, %c1_65] : memref<1x2x358xf32, #tpu.memory_space<vmem>>, vector<1x1x256xf32>
    %143 = vector.shape_cast %142 : vector<1x1x256xf32> to vector<1x256xf32>
    %c0_66 = arith.constant 0 : index
    %c1_67 = arith.constant 1 : index
    %c1_68 = arith.constant 1 : index
    %144 = vector.load %arg5[%c0_66, %c1_67, %c1_68] : memref<1x2x358xf32, #tpu.memory_space<vmem>>, vector<1x1x256xf32>
    %145 = vector.shape_cast %144 : vector<1x1x256xf32> to vector<1x256xf32>
    %c1_69 = arith.constant 1 : index
    %146 = memref.load %arg1[%c1_69] : memref<98xf32, #tpu.memory_space<smem>>
    %c50 = arith.constant 50 : index
    %147 = memref.load %arg1[%c50] : memref<98xf32, #tpu.memory_space<smem>>
    %148 = vector.broadcast %146 : f32 to vector<1x256xf32>
    %149 = arith.mulf %148, %143 : vector<1x256xf32>
    %150 = vector.broadcast %147 : f32 to vector<1x256xf32>
    %151 = arith.mulf %150, %145 : vector<1x256xf32>
    %152 = arith.addf %149, %151 : vector<1x256xf32>
    %153 = arith.addf %141, %152 : vector<1x256xf32>
    %c0_70 = arith.constant 0 : index
    %c0_71 = arith.constant 0 : index
    %c17 = arith.constant 17 : index
    %154 = vector.load %arg5[%c0_70, %c0_71, %c17] : memref<1x2x358xf32, #tpu.memory_space<vmem>>, vector<1x1x256xf32>
    %155 = vector.shape_cast %154 : vector<1x1x256xf32> to vector<1x256xf32>
    %c0_72 = arith.constant 0 : index
    %c1_73 = arith.constant 1 : index
    %c17_74 = arith.constant 17 : index
    %156 = vector.load %arg5[%c0_72, %c1_73, %c17_74] : memref<1x2x358xf32, #tpu.memory_space<vmem>>, vector<1x1x256xf32>
    %157 = vector.shape_cast %156 : vector<1x1x256xf32> to vector<1x256xf32>
    %c8 = arith.constant 8 : index
    %158 = memref.load %arg1[%c8] : memref<98xf32, #tpu.memory_space<smem>>
    %c57 = arith.constant 57 : index
    %159 = memref.load %arg1[%c57] : memref<98xf32, #tpu.memory_space<smem>>
    %160 = vector.broadcast %158 : f32 to vector<1x256xf32>
    %161 = arith.mulf %160, %155 : vector<1x256xf32>
    %162 = vector.broadcast %159 : f32 to vector<1x256xf32>
    %163 = arith.mulf %162, %157 : vector<1x256xf32>
    %164 = arith.addf %161, %163 : vector<1x256xf32>
    %165 = arith.addf %153, %164 : vector<1x256xf32>
    %c0_75 = arith.constant 0 : index
    %c0_76 = arith.constant 0 : index
    %c33 = arith.constant 33 : index
    %166 = vector.load %arg5[%c0_75, %c0_76, %c33] : memref<1x2x358xf32, #tpu.memory_space<vmem>>, vector<1x1x256xf32>
    %167 = vector.shape_cast %166 : vector<1x1x256xf32> to vector<1x256xf32>
    %c0_77 = arith.constant 0 : index
    %c1_78 = arith.constant 1 : index
    %c33_79 = arith.constant 33 : index
    %168 = vector.load %arg5[%c0_77, %c1_78, %c33_79] : memref<1x2x358xf32, #tpu.memory_space<vmem>>, vector<1x1x256xf32>
    %169 = vector.shape_cast %168 : vector<1x1x256xf32> to vector<1x256xf32>
    %c15 = arith.constant 15 : index
    %170 = memref.load %arg1[%c15] : memref<98xf32, #tpu.memory_space<smem>>
    %c64_80 = arith.constant 64 : index
    %171 = memref.load %arg1[%c64_80] : memref<98xf32, #tpu.memory_space<smem>>
    %172 = vector.broadcast %170 : f32 to vector<1x256xf32>
    %173 = arith.mulf %172, %167 : vector<1x256xf32>
    %174 = vector.broadcast %171 : f32 to vector<1x256xf32>
    %175 = arith.mulf %174, %169 : vector<1x256xf32>
    %176 = arith.addf %173, %175 : vector<1x256xf32>
    %177 = arith.addf %165, %176 : vector<1x256xf32>
    %c0_81 = arith.constant 0 : index
    %c0_82 = arith.constant 0 : index
    %c49_83 = arith.constant 49 : index
    %178 = vector.load %arg5[%c0_81, %c0_82, %c49_83] : memref<1x2x358xf32, #tpu.memory_space<vmem>>, vector<1x1x256xf32>
    %179 = vector.shape_cast %178 : vector<1x1x256xf32> to vector<1x256xf32>
    %c0_84 = arith.constant 0 : index
    %c1_85 = arith.constant 1 : index
    %c49_86 = arith.constant 49 : index
    %180 = vector.load %arg5[%c0_84, %c1_85, %c49_86] : memref<1x2x358xf32, #tpu.memory_space<vmem>>, vector<1x1x256xf32>
    %181 = vector.shape_cast %180 : vector<1x1x256xf32> to vector<1x256xf32>
    %c22 = arith.constant 22 : index
    %182 = memref.load %arg1[%c22] : memref<98xf32, #tpu.memory_space<smem>>
    %c71 = arith.constant 71 : index
    %183 = memref.load %arg1[%c71] : memref<98xf32, #tpu.memory_space<smem>>
    %184 = vector.broadcast %182 : f32 to vector<1x256xf32>
    %185 = arith.mulf %184, %179 : vector<1x256xf32>
    %186 = vector.broadcast %183 : f32 to vector<1x256xf32>
    %187 = arith.mulf %186, %181 : vector<1x256xf32>
    %188 = arith.addf %185, %187 : vector<1x256xf32>
    %189 = arith.addf %177, %188 : vector<1x256xf32>
    %c0_87 = arith.constant 0 : index
    %c0_88 = arith.constant 0 : index
    %c65 = arith.constant 65 : index
    %190 = vector.load %arg5[%c0_87, %c0_88, %c65] : memref<1x2x358xf32, #tpu.memory_space<vmem>>, vector<1x1x256xf32>
    %191 = vector.shape_cast %190 : vector<1x1x256xf32> to vector<1x256xf32>
    %c0_89 = arith.constant 0 : index
    %c1_90 = arith.constant 1 : index
    %c65_91 = arith.constant 65 : index
    %192 = vector.load %arg5[%c0_89, %c1_90, %c65_91] : memref<1x2x358xf32, #tpu.memory_space<vmem>>, vector<1x1x256xf32>
    %193 = vector.shape_cast %192 : vector<1x1x256xf32> to vector<1x256xf32>
    %c29 = arith.constant 29 : index
    %194 = memref.load %arg1[%c29] : memref<98xf32, #tpu.memory_space<smem>>
    %c78 = arith.constant 78 : index
    %195 = memref.load %arg1[%c78] : memref<98xf32, #tpu.memory_space<smem>>
    %196 = vector.broadcast %194 : f32 to vector<1x256xf32>
    %197 = arith.mulf %196, %191 : vector<1x256xf32>
    %198 = vector.broadcast %195 : f32 to vector<1x256xf32>
    %199 = arith.mulf %198, %193 : vector<1x256xf32>
    %200 = arith.addf %197, %199 : vector<1x256xf32>
    %201 = arith.addf %189, %200 : vector<1x256xf32>
    %c0_92 = arith.constant 0 : index
    %c0_93 = arith.constant 0 : index
    %c81 = arith.constant 81 : index
    %202 = vector.load %arg5[%c0_92, %c0_93, %c81] : memref<1x2x358xf32, #tpu.memory_space<vmem>>, vector<1x1x256xf32>
    %203 = vector.shape_cast %202 : vector<1x1x256xf32> to vector<1x256xf32>
    %c0_94 = arith.constant 0 : index
    %c1_95 = arith.constant 1 : index
    %c81_96 = arith.constant 81 : index
    %204 = vector.load %arg5[%c0_94, %c1_95, %c81_96] : memref<1x2x358xf32, #tpu.memory_space<vmem>>, vector<1x1x256xf32>
    %205 = vector.shape_cast %204 : vector<1x1x256xf32> to vector<1x256xf32>
    %c36 = arith.constant 36 : index
    %206 = memref.load %arg1[%c36] : memref<98xf32, #tpu.memory_space<smem>>
    %c85 = arith.constant 85 : index
    %207 = memref.load %arg1[%c85] : memref<98xf32, #tpu.memory_space<smem>>
    %208 = vector.broadcast %206 : f32 to vector<1x256xf32>
    %209 = arith.mulf %208, %203 : vector<1x256xf32>
    %210 = vector.broadcast %207 : f32 to vector<1x256xf32>
    %211 = arith.mulf %210, %205 : vector<1x256xf32>
    %212 = arith.addf %209, %211 : vector<1x256xf32>
    %213 = arith.addf %201, %212 : vector<1x256xf32>
    %c0_97 = arith.constant 0 : index
    %c0_98 = arith.constant 0 : index
    %c97 = arith.constant 97 : index
    %214 = vector.load %arg5[%c0_97, %c0_98, %c97] : memref<1x2x358xf32, #tpu.memory_space<vmem>>, vector<1x1x256xf32>
    %215 = vector.shape_cast %214 : vector<1x1x256xf32> to vector<1x256xf32>
    %c0_99 = arith.constant 0 : index
    %c1_100 = arith.constant 1 : index
    %c97_101 = arith.constant 97 : index
    %216 = vector.load %arg5[%c0_99, %c1_100, %c97_101] : memref<1x2x358xf32, #tpu.memory_space<vmem>>, vector<1x1x256xf32>
    %217 = vector.shape_cast %216 : vector<1x1x256xf32> to vector<1x256xf32>
    %c43 = arith.constant 43 : index
    %218 = memref.load %arg1[%c43] : memref<98xf32, #tpu.memory_space<smem>>
    %c92 = arith.constant 92 : index
    %219 = memref.load %arg1[%c92] : memref<98xf32, #tpu.memory_space<smem>>
    %220 = vector.broadcast %218 : f32 to vector<1x256xf32>
    %221 = arith.mulf %220, %215 : vector<1x256xf32>
    %222 = vector.broadcast %219 : f32 to vector<1x256xf32>
    %223 = arith.mulf %222, %217 : vector<1x256xf32>
    %224 = arith.addf %221, %223 : vector<1x256xf32>
    %225 = arith.addf %213, %224 : vector<1x256xf32>
    %226 = arith.mulf %140, %225 : vector<1x256xf32>
    %227 = arith.addf %129, %226 : vector<1x256xf32>
    %c-1_i32 = arith.constant -1 : i32
    %228 = vector.broadcast %c-1_i32 : i32 to vector<1x256xi32>
    %229 = arith.addi %30, %228 : vector<1x256xi32>
    %c0_i32_102 = arith.constant 0 : i32
    %230 = vector.broadcast %c0_i32_102 : i32 to vector<1x256xi32>
    %231 = arith.cmpi sge, %229, %230 : vector<1x256xi32>
    %c-1_i32_103 = arith.constant -1 : i32
    %232 = vector.broadcast %c-1_i32_103 : i32 to vector<1x256xi32>
    %233 = arith.addi %30, %232 : vector<1x256xi32>
    %c16_i32_104 = arith.constant 16 : i32
    %234 = vector.broadcast %c16_i32_104 : i32 to vector<1x256xi32>
    %235 = arith.cmpi slt, %233, %234 : vector<1x256xi32>
    %236 = arith.andi %231, %235 : vector<1x256xi1>
    %237 = arith.extui %236 : vector<1x256xi1> to vector<1x256xi32>
    %238 = arith.sitofp %237 : vector<1x256xi32> to vector<1x256xf32>
    %cst_105 = arith.constant 0.000000e+00 : f32
    %239 = vector.broadcast %cst_105 : f32 to vector<1x256xf32>
    %c0_106 = arith.constant 0 : index
    %c0_107 = arith.constant 0 : index
    %c2 = arith.constant 2 : index
    %240 = vector.load %arg5[%c0_106, %c0_107, %c2] : memref<1x2x358xf32, #tpu.memory_space<vmem>>, vector<1x1x256xf32>
    %241 = vector.shape_cast %240 : vector<1x1x256xf32> to vector<1x256xf32>
    %c0_108 = arith.constant 0 : index
    %c1_109 = arith.constant 1 : index
    %c2_110 = arith.constant 2 : index
    %242 = vector.load %arg5[%c0_108, %c1_109, %c2_110] : memref<1x2x358xf32, #tpu.memory_space<vmem>>, vector<1x1x256xf32>
    %243 = vector.shape_cast %242 : vector<1x1x256xf32> to vector<1x256xf32>
    %c2_111 = arith.constant 2 : index
    %244 = memref.load %arg1[%c2_111] : memref<98xf32, #tpu.memory_space<smem>>
    %c51_112 = arith.constant 51 : index
    %245 = memref.load %arg1[%c51_112] : memref<98xf32, #tpu.memory_space<smem>>
    %246 = vector.broadcast %244 : f32 to vector<1x256xf32>
    %247 = arith.mulf %246, %241 : vector<1x256xf32>
    %248 = vector.broadcast %245 : f32 to vector<1x256xf32>
    %249 = arith.mulf %248, %243 : vector<1x256xf32>
    %250 = arith.addf %247, %249 : vector<1x256xf32>
    %251 = arith.addf %239, %250 : vector<1x256xf32>
    %c0_113 = arith.constant 0 : index
    %c0_114 = arith.constant 0 : index
    %c18 = arith.constant 18 : index
    %252 = vector.load %arg5[%c0_113, %c0_114, %c18] : memref<1x2x358xf32, #tpu.memory_space<vmem>>, vector<1x1x256xf32>
    %253 = vector.shape_cast %252 : vector<1x1x256xf32> to vector<1x256xf32>
    %c0_115 = arith.constant 0 : index
    %c1_116 = arith.constant 1 : index
    %c18_117 = arith.constant 18 : index
    %254 = vector.load %arg5[%c0_115, %c1_116, %c18_117] : memref<1x2x358xf32, #tpu.memory_space<vmem>>, vector<1x1x256xf32>
    %255 = vector.shape_cast %254 : vector<1x1x256xf32> to vector<1x256xf32>
    %c9 = arith.constant 9 : index
    %256 = memref.load %arg1[%c9] : memref<98xf32, #tpu.memory_space<smem>>
    %c58 = arith.constant 58 : index
    %257 = memref.load %arg1[%c58] : memref<98xf32, #tpu.memory_space<smem>>
    %258 = vector.broadcast %256 : f32 to vector<1x256xf32>
    %259 = arith.mulf %258, %253 : vector<1x256xf32>
    %260 = vector.broadcast %257 : f32 to vector<1x256xf32>
    %261 = arith.mulf %260, %255 : vector<1x256xf32>
    %262 = arith.addf %259, %261 : vector<1x256xf32>
    %263 = arith.addf %251, %262 : vector<1x256xf32>
    %c0_118 = arith.constant 0 : index
    %c0_119 = arith.constant 0 : index
    %c34 = arith.constant 34 : index
    %264 = vector.load %arg5[%c0_118, %c0_119, %c34] : memref<1x2x358xf32, #tpu.memory_space<vmem>>, vector<1x1x256xf32>
    %265 = vector.shape_cast %264 : vector<1x1x256xf32> to vector<1x256xf32>
    %c0_120 = arith.constant 0 : index
    %c1_121 = arith.constant 1 : index
    %c34_122 = arith.constant 34 : index
    %266 = vector.load %arg5[%c0_120, %c1_121, %c34_122] : memref<1x2x358xf32, #tpu.memory_space<vmem>>, vector<1x1x256xf32>
    %267 = vector.shape_cast %266 : vector<1x1x256xf32> to vector<1x256xf32>
    %c16_123 = arith.constant 16 : index
    %268 = memref.load %arg1[%c16_123] : memref<98xf32, #tpu.memory_space<smem>>
    %c65_124 = arith.constant 65 : index
    %269 = memref.load %arg1[%c65_124] : memref<98xf32, #tpu.memory_space<smem>>
    %270 = vector.broadcast %268 : f32 to vector<1x256xf32>
    %271 = arith.mulf %270, %265 : vector<1x256xf32>
    %272 = vector.broadcast %269 : f32 to vector<1x256xf32>
    %273 = arith.mulf %272, %267 : vector<1x256xf32>
    %274 = arith.addf %271, %273 : vector<1x256xf32>
    %275 = arith.addf %263, %274 : vector<1x256xf32>
    %c0_125 = arith.constant 0 : index
    %c0_126 = arith.constant 0 : index
    %c50_127 = arith.constant 50 : index
    %276 = vector.load %arg5[%c0_125, %c0_126, %c50_127] : memref<1x2x358xf32, #tpu.memory_space<vmem>>, vector<1x1x256xf32>
    %277 = vector.shape_cast %276 : vector<1x1x256xf32> to vector<1x256xf32>
    %c0_128 = arith.constant 0 : index
    %c1_129 = arith.constant 1 : index
    %c50_130 = arith.constant 50 : index
    %278 = vector.load %arg5[%c0_128, %c1_129, %c50_130] : memref<1x2x358xf32, #tpu.memory_space<vmem>>, vector<1x1x256xf32>
    %279 = vector.shape_cast %278 : vector<1x1x256xf32> to vector<1x256xf32>
    %c23 = arith.constant 23 : index
    %280 = memref.load %arg1[%c23] : memref<98xf32, #tpu.memory_space<smem>>
    %c72 = arith.constant 72 : index
    %281 = memref.load %arg1[%c72] : memref<98xf32, #tpu.memory_space<smem>>
    %282 = vector.broadcast %280 : f32 to vector<1x256xf32>
    %283 = arith.mulf %282, %277 : vector<1x256xf32>
    %284 = vector.broadcast %281 : f32 to vector<1x256xf32>
    %285 = arith.mulf %284, %279 : vector<1x256xf32>
    %286 = arith.addf %283, %285 : vector<1x256xf32>
    %287 = arith.addf %275, %286 : vector<1x256xf32>
    %c0_131 = arith.constant 0 : index
    %c0_132 = arith.constant 0 : index
    %c66 = arith.constant 66 : index
    %288 = vector.load %arg5[%c0_131, %c0_132, %c66] : memref<1x2x358xf32, #tpu.memory_space<vmem>>, vector<1x1x256xf32>
    %289 = vector.shape_cast %288 : vector<1x1x256xf32> to vector<1x256xf32>
    %c0_133 = arith.constant 0 : index
    %c1_134 = arith.constant 1 : index
    %c66_135 = arith.constant 66 : index
    %290 = vector.load %arg5[%c0_133, %c1_134, %c66_135] : memref<1x2x358xf32, #tpu.memory_space<vmem>>, vector<1x1x256xf32>
    %291 = vector.shape_cast %290 : vector<1x1x256xf32> to vector<1x256xf32>
    %c30 = arith.constant 30 : index
    %292 = memref.load %arg1[%c30] : memref<98xf32, #tpu.memory_space<smem>>
    %c79 = arith.constant 79 : index
    %293 = memref.load %arg1[%c79] : memref<98xf32, #tpu.memory_space<smem>>
    %294 = vector.broadcast %292 : f32 to vector<1x256xf32>
    %295 = arith.mulf %294, %289 : vector<1x256xf32>
    %296 = vector.broadcast %293 : f32 to vector<1x256xf32>
    %297 = arith.mulf %296, %291 : vector<1x256xf32>
    %298 = arith.addf %295, %297 : vector<1x256xf32>
    %299 = arith.addf %287, %298 : vector<1x256xf32>
    %c0_136 = arith.constant 0 : index
    %c0_137 = arith.constant 0 : index
    %c82 = arith.constant 82 : index
    %300 = vector.load %arg5[%c0_136, %c0_137, %c82] : memref<1x2x358xf32, #tpu.memory_space<vmem>>, vector<1x1x256xf32>
    %301 = vector.shape_cast %300 : vector<1x1x256xf32> to vector<1x256xf32>
    %c0_138 = arith.constant 0 : index
    %c1_139 = arith.constant 1 : index
    %c82_140 = arith.constant 82 : index
    %302 = vector.load %arg5[%c0_138, %c1_139, %c82_140] : memref<1x2x358xf32, #tpu.memory_space<vmem>>, vector<1x1x256xf32>
    %303 = vector.shape_cast %302 : vector<1x1x256xf32> to vector<1x256xf32>
    %c37 = arith.constant 37 : index
    %304 = memref.load %arg1[%c37] : memref<98xf32, #tpu.memory_space<smem>>
    %c86 = arith.constant 86 : index
    %305 = memref.load %arg1[%c86] : memref<98xf32, #tpu.memory_space<smem>>
    %306 = vector.broadcast %304 : f32 to vector<1x256xf32>
    %307 = arith.mulf %306, %301 : vector<1x256xf32>
    %308 = vector.broadcast %305 : f32 to vector<1x256xf32>
    %309 = arith.mulf %308, %303 : vector<1x256xf32>
    %310 = arith.addf %307, %309 : vector<1x256xf32>
    %311 = arith.addf %299, %310 : vector<1x256xf32>
    %c0_141 = arith.constant 0 : index
    %c0_142 = arith.constant 0 : index
    %c98 = arith.constant 98 : index
    %312 = vector.load %arg5[%c0_141, %c0_142, %c98] : memref<1x2x358xf32, #tpu.memory_space<vmem>>, vector<1x1x256xf32>
    %313 = vector.shape_cast %312 : vector<1x1x256xf32> to vector<1x256xf32>
    %c0_143 = arith.constant 0 : index
    %c1_144 = arith.constant 1 : index
    %c98_145 = arith.constant 98 : index
    %314 = vector.load %arg5[%c0_143, %c1_144, %c98_145] : memref<1x2x358xf32, #tpu.memory_space<vmem>>, vector<1x1x256xf32>
    %315 = vector.shape_cast %314 : vector<1x1x256xf32> to vector<1x256xf32>
    %c44 = arith.constant 44 : index
    %316 = memref.load %arg1[%c44] : memref<98xf32, #tpu.memory_space<smem>>
    %c93 = arith.constant 93 : index
    %317 = memref.load %arg1[%c93] : memref<98xf32, #tpu.memory_space<smem>>
    %318 = vector.broadcast %316 : f32 to vector<1x256xf32>
    %319 = arith.mulf %318, %313 : vector<1x256xf32>
    %320 = vector.broadcast %317 : f32 to vector<1x256xf32>
    %321 = arith.mulf %320, %315 : vector<1x256xf32>
    %322 = arith.addf %319, %321 : vector<1x256xf32>
    %323 = arith.addf %311, %322 : vector<1x256xf32>
    %324 = arith.mulf %238, %323 : vector<1x256xf32>
    %325 = arith.addf %227, %324 : vector<1x256xf32>
    %c0_i32_146 = arith.constant 0 : i32
    %326 = vector.broadcast %c0_i32_146 : i32 to vector<1x256xi32>
    %327 = arith.addi %30, %326 : vector<1x256xi32>
    %c0_i32_147 = arith.constant 0 : i32
    %328 = vector.broadcast %c0_i32_147 : i32 to vector<1x256xi32>
    %329 = arith.cmpi sge, %327, %328 : vector<1x256xi32>
    %c0_i32_148 = arith.constant 0 : i32
    %330 = vector.broadcast %c0_i32_148 : i32 to vector<1x256xi32>
    %331 = arith.addi %30, %330 : vector<1x256xi32>
    %c16_i32_149 = arith.constant 16 : i32
    %332 = vector.broadcast %c16_i32_149 : i32 to vector<1x256xi32>
    %333 = arith.cmpi slt, %331, %332 : vector<1x256xi32>
    %334 = arith.andi %329, %333 : vector<1x256xi1>
    %335 = arith.extui %334 : vector<1x256xi1> to vector<1x256xi32>
    %336 = arith.sitofp %335 : vector<1x256xi32> to vector<1x256xf32>
    %cst_150 = arith.constant 0.000000e+00 : f32
    %337 = vector.broadcast %cst_150 : f32 to vector<1x256xf32>
    %c0_151 = arith.constant 0 : index
    %c0_152 = arith.constant 0 : index
    %c3 = arith.constant 3 : index
    %338 = vector.load %arg5[%c0_151, %c0_152, %c3] : memref<1x2x358xf32, #tpu.memory_space<vmem>>, vector<1x1x256xf32>
    %339 = vector.shape_cast %338 : vector<1x1x256xf32> to vector<1x256xf32>
    %c0_153 = arith.constant 0 : index
    %c1_154 = arith.constant 1 : index
    %c3_155 = arith.constant 3 : index
    %340 = vector.load %arg5[%c0_153, %c1_154, %c3_155] : memref<1x2x358xf32, #tpu.memory_space<vmem>>, vector<1x1x256xf32>
    %341 = vector.shape_cast %340 : vector<1x1x256xf32> to vector<1x256xf32>
    %c3_156 = arith.constant 3 : index
    %342 = memref.load %arg1[%c3_156] : memref<98xf32, #tpu.memory_space<smem>>
    %c52 = arith.constant 52 : index
    %343 = memref.load %arg1[%c52] : memref<98xf32, #tpu.memory_space<smem>>
    %344 = vector.broadcast %342 : f32 to vector<1x256xf32>
    %345 = arith.mulf %344, %339 : vector<1x256xf32>
    %346 = vector.broadcast %343 : f32 to vector<1x256xf32>
    %347 = arith.mulf %346, %341 : vector<1x256xf32>
    %348 = arith.addf %345, %347 : vector<1x256xf32>
    %349 = arith.addf %337, %348 : vector<1x256xf32>
    %c0_157 = arith.constant 0 : index
    %c0_158 = arith.constant 0 : index
    %c19 = arith.constant 19 : index
    %350 = vector.load %arg5[%c0_157, %c0_158, %c19] : memref<1x2x358xf32, #tpu.memory_space<vmem>>, vector<1x1x256xf32>
    %351 = vector.shape_cast %350 : vector<1x1x256xf32> to vector<1x256xf32>
    %c0_159 = arith.constant 0 : index
    %c1_160 = arith.constant 1 : index
    %c19_161 = arith.constant 19 : index
    %352 = vector.load %arg5[%c0_159, %c1_160, %c19_161] : memref<1x2x358xf32, #tpu.memory_space<vmem>>, vector<1x1x256xf32>
    %353 = vector.shape_cast %352 : vector<1x1x256xf32> to vector<1x256xf32>
    %c10 = arith.constant 10 : index
    %354 = memref.load %arg1[%c10] : memref<98xf32, #tpu.memory_space<smem>>
    %c59 = arith.constant 59 : index
    %355 = memref.load %arg1[%c59] : memref<98xf32, #tpu.memory_space<smem>>
    %356 = vector.broadcast %354 : f32 to vector<1x256xf32>
    %357 = arith.mulf %356, %351 : vector<1x256xf32>
    %358 = vector.broadcast %355 : f32 to vector<1x256xf32>
    %359 = arith.mulf %358, %353 : vector<1x256xf32>
    %360 = arith.addf %357, %359 : vector<1x256xf32>
    %361 = arith.addf %349, %360 : vector<1x256xf32>
    %c0_162 = arith.constant 0 : index
    %c0_163 = arith.constant 0 : index
    %c35_164 = arith.constant 35 : index
    %362 = vector.load %arg5[%c0_162, %c0_163, %c35_164] : memref<1x2x358xf32, #tpu.memory_space<vmem>>, vector<1x1x256xf32>
    %363 = vector.shape_cast %362 : vector<1x1x256xf32> to vector<1x256xf32>
    %c0_165 = arith.constant 0 : index
    %c1_166 = arith.constant 1 : index
    %c35_167 = arith.constant 35 : index
    %364 = vector.load %arg5[%c0_165, %c1_166, %c35_167] : memref<1x2x358xf32, #tpu.memory_space<vmem>>, vector<1x1x256xf32>
    %365 = vector.shape_cast %364 : vector<1x1x256xf32> to vector<1x256xf32>
    %c17_168 = arith.constant 17 : index
    %366 = memref.load %arg1[%c17_168] : memref<98xf32, #tpu.memory_space<smem>>
    %c66_169 = arith.constant 66 : index
    %367 = memref.load %arg1[%c66_169] : memref<98xf32, #tpu.memory_space<smem>>
    %368 = vector.broadcast %366 : f32 to vector<1x256xf32>
    %369 = arith.mulf %368, %363 : vector<1x256xf32>
    %370 = vector.broadcast %367 : f32 to vector<1x256xf32>
    %371 = arith.mulf %370, %365 : vector<1x256xf32>
    %372 = arith.addf %369, %371 : vector<1x256xf32>
    %373 = arith.addf %361, %372 : vector<1x256xf32>
    %c0_170 = arith.constant 0 : index
    %c0_171 = arith.constant 0 : index
    %c51_172 = arith.constant 51 : index
    %374 = vector.load %arg5[%c0_170, %c0_171, %c51_172] : memref<1x2x358xf32, #tpu.memory_space<vmem>>, vector<1x1x256xf32>
    %375 = vector.shape_cast %374 : vector<1x1x256xf32> to vector<1x256xf32>
    %c0_173 = arith.constant 0 : index
    %c1_174 = arith.constant 1 : index
    %c51_175 = arith.constant 51 : index
    %376 = vector.load %arg5[%c0_173, %c1_174, %c51_175] : memref<1x2x358xf32, #tpu.memory_space<vmem>>, vector<1x1x256xf32>
    %377 = vector.shape_cast %376 : vector<1x1x256xf32> to vector<1x256xf32>
    %c24 = arith.constant 24 : index
    %378 = memref.load %arg1[%c24] : memref<98xf32, #tpu.memory_space<smem>>
    %c73 = arith.constant 73 : index
    %379 = memref.load %arg1[%c73] : memref<98xf32, #tpu.memory_space<smem>>
    %380 = vector.broadcast %378 : f32 to vector<1x256xf32>
    %381 = arith.mulf %380, %375 : vector<1x256xf32>
    %382 = vector.broadcast %379 : f32 to vector<1x256xf32>
    %383 = arith.mulf %382, %377 : vector<1x256xf32>
    %384 = arith.addf %381, %383 : vector<1x256xf32>
    %385 = arith.addf %373, %384 : vector<1x256xf32>
    %c0_176 = arith.constant 0 : index
    %c0_177 = arith.constant 0 : index
    %c67 = arith.constant 67 : index
    %386 = vector.load %arg5[%c0_176, %c0_177, %c67] : memref<1x2x358xf32, #tpu.memory_space<vmem>>, vector<1x1x256xf32>
    %387 = vector.shape_cast %386 : vector<1x1x256xf32> to vector<1x256xf32>
    %c0_178 = arith.constant 0 : index
    %c1_179 = arith.constant 1 : index
    %c67_180 = arith.constant 67 : index
    %388 = vector.load %arg5[%c0_178, %c1_179, %c67_180] : memref<1x2x358xf32, #tpu.memory_space<vmem>>, vector<1x1x256xf32>
    %389 = vector.shape_cast %388 : vector<1x1x256xf32> to vector<1x256xf32>
    %c31 = arith.constant 31 : index
    %390 = memref.load %arg1[%c31] : memref<98xf32, #tpu.memory_space<smem>>
    %c80_181 = arith.constant 80 : index
    %391 = memref.load %arg1[%c80_181] : memref<98xf32, #tpu.memory_space<smem>>
    %392 = vector.broadcast %390 : f32 to vector<1x256xf32>
    %393 = arith.mulf %392, %387 : vector<1x256xf32>
    %394 = vector.broadcast %391 : f32 to vector<1x256xf32>
    %395 = arith.mulf %394, %389 : vector<1x256xf32>
    %396 = arith.addf %393, %395 : vector<1x256xf32>
    %397 = arith.addf %385, %396 : vector<1x256xf32>
    %c0_182 = arith.constant 0 : index
    %c0_183 = arith.constant 0 : index
    %c83 = arith.constant 83 : index
    %398 = vector.load %arg5[%c0_182, %c0_183, %c83] : memref<1x2x358xf32, #tpu.memory_space<vmem>>, vector<1x1x256xf32>
    %399 = vector.shape_cast %398 : vector<1x1x256xf32> to vector<1x256xf32>
    %c0_184 = arith.constant 0 : index
    %c1_185 = arith.constant 1 : index
    %c83_186 = arith.constant 83 : index
    %400 = vector.load %arg5[%c0_184, %c1_185, %c83_186] : memref<1x2x358xf32, #tpu.memory_space<vmem>>, vector<1x1x256xf32>
    %401 = vector.shape_cast %400 : vector<1x1x256xf32> to vector<1x256xf32>
    %c38 = arith.constant 38 : index
    %402 = memref.load %arg1[%c38] : memref<98xf32, #tpu.memory_space<smem>>
    %c87 = arith.constant 87 : index
    %403 = memref.load %arg1[%c87] : memref<98xf32, #tpu.memory_space<smem>>
    %404 = vector.broadcast %402 : f32 to vector<1x256xf32>
    %405 = arith.mulf %404, %399 : vector<1x256xf32>
    %406 = vector.broadcast %403 : f32 to vector<1x256xf32>
    %407 = arith.mulf %406, %401 : vector<1x256xf32>
    %408 = arith.addf %405, %407 : vector<1x256xf32>
    %409 = arith.addf %397, %408 : vector<1x256xf32>
    %c0_187 = arith.constant 0 : index
    %c0_188 = arith.constant 0 : index
    %c99 = arith.constant 99 : index
    %410 = vector.load %arg5[%c0_187, %c0_188, %c99] : memref<1x2x358xf32, #tpu.memory_space<vmem>>, vector<1x1x256xf32>
    %411 = vector.shape_cast %410 : vector<1x1x256xf32> to vector<1x256xf32>
    %c0_189 = arith.constant 0 : index
    %c1_190 = arith.constant 1 : index
    %c99_191 = arith.constant 99 : index
    %412 = vector.load %arg5[%c0_189, %c1_190, %c99_191] : memref<1x2x358xf32, #tpu.memory_space<vmem>>, vector<1x1x256xf32>
    %413 = vector.shape_cast %412 : vector<1x1x256xf32> to vector<1x256xf32>
    %c45 = arith.constant 45 : index
    %414 = memref.load %arg1[%c45] : memref<98xf32, #tpu.memory_space<smem>>
    %c94 = arith.constant 94 : index
    %415 = memref.load %arg1[%c94] : memref<98xf32, #tpu.memory_space<smem>>
    %416 = vector.broadcast %414 : f32 to vector<1x256xf32>
    %417 = arith.mulf %416, %411 : vector<1x256xf32>
    %418 = vector.broadcast %415 : f32 to vector<1x256xf32>
    %419 = arith.mulf %418, %413 : vector<1x256xf32>
    %420 = arith.addf %417, %419 : vector<1x256xf32>
    %421 = arith.addf %409, %420 : vector<1x256xf32>
    %422 = arith.mulf %336, %421 : vector<1x256xf32>
    %423 = arith.addf %325, %422 : vector<1x256xf32>
    %c1_i32_192 = arith.constant 1 : i32
    %424 = vector.broadcast %c1_i32_192 : i32 to vector<1x256xi32>
    %425 = arith.addi %30, %424 : vector<1x256xi32>
    %c0_i32_193 = arith.constant 0 : i32
    %426 = vector.broadcast %c0_i32_193 : i32 to vector<1x256xi32>
    %427 = arith.cmpi sge, %425, %426 : vector<1x256xi32>
    %c1_i32_194 = arith.constant 1 : i32
    %428 = vector.broadcast %c1_i32_194 : i32 to vector<1x256xi32>
    %429 = arith.addi %30, %428 : vector<1x256xi32>
    %c16_i32_195 = arith.constant 16 : i32
    %430 = vector.broadcast %c16_i32_195 : i32 to vector<1x256xi32>
    %431 = arith.cmpi slt, %429, %430 : vector<1x256xi32>
    %432 = arith.andi %427, %431 : vector<1x256xi1>
    %433 = arith.extui %432 : vector<1x256xi1> to vector<1x256xi32>
    %434 = arith.sitofp %433 : vector<1x256xi32> to vector<1x256xf32>
    %cst_196 = arith.constant 0.000000e+00 : f32
    %435 = vector.broadcast %cst_196 : f32 to vector<1x256xf32>
    %c0_197 = arith.constant 0 : index
    %c0_198 = arith.constant 0 : index
    %c4 = arith.constant 4 : index
    %436 = vector.load %arg5[%c0_197, %c0_198, %c4] : memref<1x2x358xf32, #tpu.memory_space<vmem>>, vector<1x1x256xf32>
    %437 = vector.shape_cast %436 : vector<1x1x256xf32> to vector<1x256xf32>
    %c0_199 = arith.constant 0 : index
    %c1_200 = arith.constant 1 : index
    %c4_201 = arith.constant 4 : index
    %438 = vector.load %arg5[%c0_199, %c1_200, %c4_201] : memref<1x2x358xf32, #tpu.memory_space<vmem>>, vector<1x1x256xf32>
    %439 = vector.shape_cast %438 : vector<1x1x256xf32> to vector<1x256xf32>
    %c4_202 = arith.constant 4 : index
    %440 = memref.load %arg1[%c4_202] : memref<98xf32, #tpu.memory_space<smem>>
    %c53 = arith.constant 53 : index
    %441 = memref.load %arg1[%c53] : memref<98xf32, #tpu.memory_space<smem>>
    %442 = vector.broadcast %440 : f32 to vector<1x256xf32>
    %443 = arith.mulf %442, %437 : vector<1x256xf32>
    %444 = vector.broadcast %441 : f32 to vector<1x256xf32>
    %445 = arith.mulf %444, %439 : vector<1x256xf32>
    %446 = arith.addf %443, %445 : vector<1x256xf32>
    %447 = arith.addf %435, %446 : vector<1x256xf32>
    %c0_203 = arith.constant 0 : index
    %c0_204 = arith.constant 0 : index
    %c20 = arith.constant 20 : index
    %448 = vector.load %arg5[%c0_203, %c0_204, %c20] : memref<1x2x358xf32, #tpu.memory_space<vmem>>, vector<1x1x256xf32>
    %449 = vector.shape_cast %448 : vector<1x1x256xf32> to vector<1x256xf32>
    %c0_205 = arith.constant 0 : index
    %c1_206 = arith.constant 1 : index
    %c20_207 = arith.constant 20 : index
    %450 = vector.load %arg5[%c0_205, %c1_206, %c20_207] : memref<1x2x358xf32, #tpu.memory_space<vmem>>, vector<1x1x256xf32>
    %451 = vector.shape_cast %450 : vector<1x1x256xf32> to vector<1x256xf32>
    %c11 = arith.constant 11 : index
    %452 = memref.load %arg1[%c11] : memref<98xf32, #tpu.memory_space<smem>>
    %c60 = arith.constant 60 : index
    %453 = memref.load %arg1[%c60] : memref<98xf32, #tpu.memory_space<smem>>
    %454 = vector.broadcast %452 : f32 to vector<1x256xf32>
    %455 = arith.mulf %454, %449 : vector<1x256xf32>
    %456 = vector.broadcast %453 : f32 to vector<1x256xf32>
    %457 = arith.mulf %456, %451 : vector<1x256xf32>
    %458 = arith.addf %455, %457 : vector<1x256xf32>
    %459 = arith.addf %447, %458 : vector<1x256xf32>
    %c0_208 = arith.constant 0 : index
    %c0_209 = arith.constant 0 : index
    %c36_210 = arith.constant 36 : index
    %460 = vector.load %arg5[%c0_208, %c0_209, %c36_210] : memref<1x2x358xf32, #tpu.memory_space<vmem>>, vector<1x1x256xf32>
    %461 = vector.shape_cast %460 : vector<1x1x256xf32> to vector<1x256xf32>
    %c0_211 = arith.constant 0 : index
    %c1_212 = arith.constant 1 : index
    %c36_213 = arith.constant 36 : index
    %462 = vector.load %arg5[%c0_211, %c1_212, %c36_213] : memref<1x2x358xf32, #tpu.memory_space<vmem>>, vector<1x1x256xf32>
    %463 = vector.shape_cast %462 : vector<1x1x256xf32> to vector<1x256xf32>
    %c18_214 = arith.constant 18 : index
    %464 = memref.load %arg1[%c18_214] : memref<98xf32, #tpu.memory_space<smem>>
    %c67_215 = arith.constant 67 : index
    %465 = memref.load %arg1[%c67_215] : memref<98xf32, #tpu.memory_space<smem>>
    %466 = vector.broadcast %464 : f32 to vector<1x256xf32>
    %467 = arith.mulf %466, %461 : vector<1x256xf32>
    %468 = vector.broadcast %465 : f32 to vector<1x256xf32>
    %469 = arith.mulf %468, %463 : vector<1x256xf32>
    %470 = arith.addf %467, %469 : vector<1x256xf32>
    %471 = arith.addf %459, %470 : vector<1x256xf32>
    %c0_216 = arith.constant 0 : index
    %c0_217 = arith.constant 0 : index
    %c52_218 = arith.constant 52 : index
    %472 = vector.load %arg5[%c0_216, %c0_217, %c52_218] : memref<1x2x358xf32, #tpu.memory_space<vmem>>, vector<1x1x256xf32>
    %473 = vector.shape_cast %472 : vector<1x1x256xf32> to vector<1x256xf32>
    %c0_219 = arith.constant 0 : index
    %c1_220 = arith.constant 1 : index
    %c52_221 = arith.constant 52 : index
    %474 = vector.load %arg5[%c0_219, %c1_220, %c52_221] : memref<1x2x358xf32, #tpu.memory_space<vmem>>, vector<1x1x256xf32>
    %475 = vector.shape_cast %474 : vector<1x1x256xf32> to vector<1x256xf32>
    %c25 = arith.constant 25 : index
    %476 = memref.load %arg1[%c25] : memref<98xf32, #tpu.memory_space<smem>>
    %c74 = arith.constant 74 : index
    %477 = memref.load %arg1[%c74] : memref<98xf32, #tpu.memory_space<smem>>
    %478 = vector.broadcast %476 : f32 to vector<1x256xf32>
    %479 = arith.mulf %478, %473 : vector<1x256xf32>
    %480 = vector.broadcast %477 : f32 to vector<1x256xf32>
    %481 = arith.mulf %480, %475 : vector<1x256xf32>
    %482 = arith.addf %479, %481 : vector<1x256xf32>
    %483 = arith.addf %471, %482 : vector<1x256xf32>
    %c0_222 = arith.constant 0 : index
    %c0_223 = arith.constant 0 : index
    %c68 = arith.constant 68 : index
    %484 = vector.load %arg5[%c0_222, %c0_223, %c68] : memref<1x2x358xf32, #tpu.memory_space<vmem>>, vector<1x1x256xf32>
    %485 = vector.shape_cast %484 : vector<1x1x256xf32> to vector<1x256xf32>
    %c0_224 = arith.constant 0 : index
    %c1_225 = arith.constant 1 : index
    %c68_226 = arith.constant 68 : index
    %486 = vector.load %arg5[%c0_224, %c1_225, %c68_226] : memref<1x2x358xf32, #tpu.memory_space<vmem>>, vector<1x1x256xf32>
    %487 = vector.shape_cast %486 : vector<1x1x256xf32> to vector<1x256xf32>
    %c32_227 = arith.constant 32 : index
    %488 = memref.load %arg1[%c32_227] : memref<98xf32, #tpu.memory_space<smem>>
    %c81_228 = arith.constant 81 : index
    %489 = memref.load %arg1[%c81_228] : memref<98xf32, #tpu.memory_space<smem>>
    %490 = vector.broadcast %488 : f32 to vector<1x256xf32>
    %491 = arith.mulf %490, %485 : vector<1x256xf32>
    %492 = vector.broadcast %489 : f32 to vector<1x256xf32>
    %493 = arith.mulf %492, %487 : vector<1x256xf32>
    %494 = arith.addf %491, %493 : vector<1x256xf32>
    %495 = arith.addf %483, %494 : vector<1x256xf32>
    %c0_229 = arith.constant 0 : index
    %c0_230 = arith.constant 0 : index
    %c84_231 = arith.constant 84 : index
    %496 = vector.load %arg5[%c0_229, %c0_230, %c84_231] : memref<1x2x358xf32, #tpu.memory_space<vmem>>, vector<1x1x256xf32>
    %497 = vector.shape_cast %496 : vector<1x1x256xf32> to vector<1x256xf32>
    %c0_232 = arith.constant 0 : index
    %c1_233 = arith.constant 1 : index
    %c84_234 = arith.constant 84 : index
    %498 = vector.load %arg5[%c0_232, %c1_233, %c84_234] : memref<1x2x358xf32, #tpu.memory_space<vmem>>, vector<1x1x256xf32>
    %499 = vector.shape_cast %498 : vector<1x1x256xf32> to vector<1x256xf32>
    %c39 = arith.constant 39 : index
    %500 = memref.load %arg1[%c39] : memref<98xf32, #tpu.memory_space<smem>>
    %c88 = arith.constant 88 : index
    %501 = memref.load %arg1[%c88] : memref<98xf32, #tpu.memory_space<smem>>
    %502 = vector.broadcast %500 : f32 to vector<1x256xf32>
    %503 = arith.mulf %502, %497 : vector<1x256xf32>
    %504 = vector.broadcast %501 : f32 to vector<1x256xf32>
    %505 = arith.mulf %504, %499 : vector<1x256xf32>
    %506 = arith.addf %503, %505 : vector<1x256xf32>
    %507 = arith.addf %495, %506 : vector<1x256xf32>
    %c0_235 = arith.constant 0 : index
    %c0_236 = arith.constant 0 : index
    %c100 = arith.constant 100 : index
    %508 = vector.load %arg5[%c0_235, %c0_236, %c100] : memref<1x2x358xf32, #tpu.memory_space<vmem>>, vector<1x1x256xf32>
    %509 = vector.shape_cast %508 : vector<1x1x256xf32> to vector<1x256xf32>
    %c0_237 = arith.constant 0 : index
    %c1_238 = arith.constant 1 : index
    %c100_239 = arith.constant 100 : index
    %510 = vector.load %arg5[%c0_237, %c1_238, %c100_239] : memref<1x2x358xf32, #tpu.memory_space<vmem>>, vector<1x1x256xf32>
    %511 = vector.shape_cast %510 : vector<1x1x256xf32> to vector<1x256xf32>
    %c46 = arith.constant 46 : index
    %512 = memref.load %arg1[%c46] : memref<98xf32, #tpu.memory_space<smem>>
    %c95 = arith.constant 95 : index
    %513 = memref.load %arg1[%c95] : memref<98xf32, #tpu.memory_space<smem>>
    %514 = vector.broadcast %512 : f32 to vector<1x256xf32>
    %515 = arith.mulf %514, %509 : vector<1x256xf32>
    %516 = vector.broadcast %513 : f32 to vector<1x256xf32>
    %517 = arith.mulf %516, %511 : vector<1x256xf32>
    %518 = arith.addf %515, %517 : vector<1x256xf32>
    %519 = arith.addf %507, %518 : vector<1x256xf32>
    %520 = arith.mulf %434, %519 : vector<1x256xf32>
    %521 = arith.addf %423, %520 : vector<1x256xf32>
    %c2_i32 = arith.constant 2 : i32
    %522 = vector.broadcast %c2_i32 : i32 to vector<1x256xi32>
    %523 = arith.addi %30, %522 : vector<1x256xi32>
    %c0_i32_240 = arith.constant 0 : i32
    %524 = vector.broadcast %c0_i32_240 : i32 to vector<1x256xi32>
    %525 = arith.cmpi sge, %523, %524 : vector<1x256xi32>
    %c2_i32_241 = arith.constant 2 : i32
    %526 = vector.broadcast %c2_i32_241 : i32 to vector<1x256xi32>
    %527 = arith.addi %30, %526 : vector<1x256xi32>
    %c16_i32_242 = arith.constant 16 : i32
    %528 = vector.broadcast %c16_i32_242 : i32 to vector<1x256xi32>
    %529 = arith.cmpi slt, %527, %528 : vector<1x256xi32>
    %530 = arith.andi %525, %529 : vector<1x256xi1>
    %531 = arith.extui %530 : vector<1x256xi1> to vector<1x256xi32>
    %532 = arith.sitofp %531 : vector<1x256xi32> to vector<1x256xf32>
    %cst_243 = arith.constant 0.000000e+00 : f32
    %533 = vector.broadcast %cst_243 : f32 to vector<1x256xf32>
    %c0_244 = arith.constant 0 : index
    %c0_245 = arith.constant 0 : index
    %c5 = arith.constant 5 : index
    %534 = vector.load %arg5[%c0_244, %c0_245, %c5] : memref<1x2x358xf32, #tpu.memory_space<vmem>>, vector<1x1x256xf32>
    %535 = vector.shape_cast %534 : vector<1x1x256xf32> to vector<1x256xf32>
    %c0_246 = arith.constant 0 : index
    %c1_247 = arith.constant 1 : index
    %c5_248 = arith.constant 5 : index
    %536 = vector.load %arg5[%c0_246, %c1_247, %c5_248] : memref<1x2x358xf32, #tpu.memory_space<vmem>>, vector<1x1x256xf32>
    %537 = vector.shape_cast %536 : vector<1x1x256xf32> to vector<1x256xf32>
    %c5_249 = arith.constant 5 : index
    %538 = memref.load %arg1[%c5_249] : memref<98xf32, #tpu.memory_space<smem>>
    %c54 = arith.constant 54 : index
    %539 = memref.load %arg1[%c54] : memref<98xf32, #tpu.memory_space<smem>>
    %540 = vector.broadcast %538 : f32 to vector<1x256xf32>
    %541 = arith.mulf %540, %535 : vector<1x256xf32>
    %542 = vector.broadcast %539 : f32 to vector<1x256xf32>
    %543 = arith.mulf %542, %537 : vector<1x256xf32>
    %544 = arith.addf %541, %543 : vector<1x256xf32>
    %545 = arith.addf %533, %544 : vector<1x256xf32>
    %c0_250 = arith.constant 0 : index
    %c0_251 = arith.constant 0 : index
    %c21_252 = arith.constant 21 : index
    %546 = vector.load %arg5[%c0_250, %c0_251, %c21_252] : memref<1x2x358xf32, #tpu.memory_space<vmem>>, vector<1x1x256xf32>
    %547 = vector.shape_cast %546 : vector<1x1x256xf32> to vector<1x256xf32>
    %c0_253 = arith.constant 0 : index
    %c1_254 = arith.constant 1 : index
    %c21_255 = arith.constant 21 : index
    %548 = vector.load %arg5[%c0_253, %c1_254, %c21_255] : memref<1x2x358xf32, #tpu.memory_space<vmem>>, vector<1x1x256xf32>
    %549 = vector.shape_cast %548 : vector<1x1x256xf32> to vector<1x256xf32>
    %c12 = arith.constant 12 : index
    %550 = memref.load %arg1[%c12] : memref<98xf32, #tpu.memory_space<smem>>
    %c61 = arith.constant 61 : index
    %551 = memref.load %arg1[%c61] : memref<98xf32, #tpu.memory_space<smem>>
    %552 = vector.broadcast %550 : f32 to vector<1x256xf32>
    %553 = arith.mulf %552, %547 : vector<1x256xf32>
    %554 = vector.broadcast %551 : f32 to vector<1x256xf32>
    %555 = arith.mulf %554, %549 : vector<1x256xf32>
    %556 = arith.addf %553, %555 : vector<1x256xf32>
    %557 = arith.addf %545, %556 : vector<1x256xf32>
    %c0_256 = arith.constant 0 : index
    %c0_257 = arith.constant 0 : index
    %c37_258 = arith.constant 37 : index
    %558 = vector.load %arg5[%c0_256, %c0_257, %c37_258] : memref<1x2x358xf32, #tpu.memory_space<vmem>>, vector<1x1x256xf32>
    %559 = vector.shape_cast %558 : vector<1x1x256xf32> to vector<1x256xf32>
    %c0_259 = arith.constant 0 : index
    %c1_260 = arith.constant 1 : index
    %c37_261 = arith.constant 37 : index
    %560 = vector.load %arg5[%c0_259, %c1_260, %c37_261] : memref<1x2x358xf32, #tpu.memory_space<vmem>>, vector<1x1x256xf32>
    %561 = vector.shape_cast %560 : vector<1x1x256xf32> to vector<1x256xf32>
    %c19_262 = arith.constant 19 : index
    %562 = memref.load %arg1[%c19_262] : memref<98xf32, #tpu.memory_space<smem>>
    %c68_263 = arith.constant 68 : index
    %563 = memref.load %arg1[%c68_263] : memref<98xf32, #tpu.memory_space<smem>>
    %564 = vector.broadcast %562 : f32 to vector<1x256xf32>
    %565 = arith.mulf %564, %559 : vector<1x256xf32>
    %566 = vector.broadcast %563 : f32 to vector<1x256xf32>
    %567 = arith.mulf %566, %561 : vector<1x256xf32>
    %568 = arith.addf %565, %567 : vector<1x256xf32>
    %569 = arith.addf %557, %568 : vector<1x256xf32>
    %c0_264 = arith.constant 0 : index
    %c0_265 = arith.constant 0 : index
    %c53_266 = arith.constant 53 : index
    %570 = vector.load %arg5[%c0_264, %c0_265, %c53_266] : memref<1x2x358xf32, #tpu.memory_space<vmem>>, vector<1x1x256xf32>
    %571 = vector.shape_cast %570 : vector<1x1x256xf32> to vector<1x256xf32>
    %c0_267 = arith.constant 0 : index
    %c1_268 = arith.constant 1 : index
    %c53_269 = arith.constant 53 : index
    %572 = vector.load %arg5[%c0_267, %c1_268, %c53_269] : memref<1x2x358xf32, #tpu.memory_space<vmem>>, vector<1x1x256xf32>
    %573 = vector.shape_cast %572 : vector<1x1x256xf32> to vector<1x256xf32>
    %c26 = arith.constant 26 : index
    %574 = memref.load %arg1[%c26] : memref<98xf32, #tpu.memory_space<smem>>
    %c75 = arith.constant 75 : index
    %575 = memref.load %arg1[%c75] : memref<98xf32, #tpu.memory_space<smem>>
    %576 = vector.broadcast %574 : f32 to vector<1x256xf32>
    %577 = arith.mulf %576, %571 : vector<1x256xf32>
    %578 = vector.broadcast %575 : f32 to vector<1x256xf32>
    %579 = arith.mulf %578, %573 : vector<1x256xf32>
    %580 = arith.addf %577, %579 : vector<1x256xf32>
    %581 = arith.addf %569, %580 : vector<1x256xf32>
    %c0_270 = arith.constant 0 : index
    %c0_271 = arith.constant 0 : index
    %c69 = arith.constant 69 : index
    %582 = vector.load %arg5[%c0_270, %c0_271, %c69] : memref<1x2x358xf32, #tpu.memory_space<vmem>>, vector<1x1x256xf32>
    %583 = vector.shape_cast %582 : vector<1x1x256xf32> to vector<1x256xf32>
    %c0_272 = arith.constant 0 : index
    %c1_273 = arith.constant 1 : index
    %c69_274 = arith.constant 69 : index
    %584 = vector.load %arg5[%c0_272, %c1_273, %c69_274] : memref<1x2x358xf32, #tpu.memory_space<vmem>>, vector<1x1x256xf32>
    %585 = vector.shape_cast %584 : vector<1x1x256xf32> to vector<1x256xf32>
    %c33_275 = arith.constant 33 : index
    %586 = memref.load %arg1[%c33_275] : memref<98xf32, #tpu.memory_space<smem>>
    %c82_276 = arith.constant 82 : index
    %587 = memref.load %arg1[%c82_276] : memref<98xf32, #tpu.memory_space<smem>>
    %588 = vector.broadcast %586 : f32 to vector<1x256xf32>
    %589 = arith.mulf %588, %583 : vector<1x256xf32>
    %590 = vector.broadcast %587 : f32 to vector<1x256xf32>
    %591 = arith.mulf %590, %585 : vector<1x256xf32>
    %592 = arith.addf %589, %591 : vector<1x256xf32>
    %593 = arith.addf %581, %592 : vector<1x256xf32>
    %c0_277 = arith.constant 0 : index
    %c0_278 = arith.constant 0 : index
    %c85_279 = arith.constant 85 : index
    %594 = vector.load %arg5[%c0_277, %c0_278, %c85_279] : memref<1x2x358xf32, #tpu.memory_space<vmem>>, vector<1x1x256xf32>
    %595 = vector.shape_cast %594 : vector<1x1x256xf32> to vector<1x256xf32>
    %c0_280 = arith.constant 0 : index
    %c1_281 = arith.constant 1 : index
    %c85_282 = arith.constant 85 : index
    %596 = vector.load %arg5[%c0_280, %c1_281, %c85_282] : memref<1x2x358xf32, #tpu.memory_space<vmem>>, vector<1x1x256xf32>
    %597 = vector.shape_cast %596 : vector<1x1x256xf32> to vector<1x256xf32>
    %c40 = arith.constant 40 : index
    %598 = memref.load %arg1[%c40] : memref<98xf32, #tpu.memory_space<smem>>
    %c89 = arith.constant 89 : index
    %599 = memref.load %arg1[%c89] : memref<98xf32, #tpu.memory_space<smem>>
    %600 = vector.broadcast %598 : f32 to vector<1x256xf32>
    %601 = arith.mulf %600, %595 : vector<1x256xf32>
    %602 = vector.broadcast %599 : f32 to vector<1x256xf32>
    %603 = arith.mulf %602, %597 : vector<1x256xf32>
    %604 = arith.addf %601, %603 : vector<1x256xf32>
    %605 = arith.addf %593, %604 : vector<1x256xf32>
    %c0_283 = arith.constant 0 : index
    %c0_284 = arith.constant 0 : index
    %c101 = arith.constant 101 : index
    %606 = vector.load %arg5[%c0_283, %c0_284, %c101] : memref<1x2x358xf32, #tpu.memory_space<vmem>>, vector<1x1x256xf32>
    %607 = vector.shape_cast %606 : vector<1x1x256xf32> to vector<1x256xf32>
    %c0_285 = arith.constant 0 : index
    %c1_286 = arith.constant 1 : index
    %c101_287 = arith.constant 101 : index
    %608 = vector.load %arg5[%c0_285, %c1_286, %c101_287] : memref<1x2x358xf32, #tpu.memory_space<vmem>>, vector<1x1x256xf32>
    %609 = vector.shape_cast %608 : vector<1x1x256xf32> to vector<1x256xf32>
    %c47 = arith.constant 47 : index
    %610 = memref.load %arg1[%c47] : memref<98xf32, #tpu.memory_space<smem>>
    %c96_288 = arith.constant 96 : index
    %611 = memref.load %arg1[%c96_288] : memref<98xf32, #tpu.memory_space<smem>>
    %612 = vector.broadcast %610 : f32 to vector<1x256xf32>
    %613 = arith.mulf %612, %607 : vector<1x256xf32>
    %614 = vector.broadcast %611 : f32 to vector<1x256xf32>
    %615 = arith.mulf %614, %609 : vector<1x256xf32>
    %616 = arith.addf %613, %615 : vector<1x256xf32>
    %617 = arith.addf %605, %616 : vector<1x256xf32>
    %618 = arith.mulf %532, %617 : vector<1x256xf32>
    %619 = arith.addf %521, %618 : vector<1x256xf32>
    %c3_i32 = arith.constant 3 : i32
    %620 = vector.broadcast %c3_i32 : i32 to vector<1x256xi32>
    %621 = arith.addi %30, %620 : vector<1x256xi32>
    %c0_i32_289 = arith.constant 0 : i32
    %622 = vector.broadcast %c0_i32_289 : i32 to vector<1x256xi32>
    %623 = arith.cmpi sge, %621, %622 : vector<1x256xi32>
    %c3_i32_290 = arith.constant 3 : i32
    %624 = vector.broadcast %c3_i32_290 : i32 to vector<1x256xi32>
    %625 = arith.addi %30, %624 : vector<1x256xi32>
    %c16_i32_291 = arith.constant 16 : i32
    %626 = vector.broadcast %c16_i32_291 : i32 to vector<1x256xi32>
    %627 = arith.cmpi slt, %625, %626 : vector<1x256xi32>
    %628 = arith.andi %623, %627 : vector<1x256xi1>
    %629 = arith.extui %628 : vector<1x256xi1> to vector<1x256xi32>
    %630 = arith.sitofp %629 : vector<1x256xi32> to vector<1x256xf32>
    %cst_292 = arith.constant 0.000000e+00 : f32
    %631 = vector.broadcast %cst_292 : f32 to vector<1x256xf32>
    %c0_293 = arith.constant 0 : index
    %c0_294 = arith.constant 0 : index
    %c6 = arith.constant 6 : index
    %632 = vector.load %arg5[%c0_293, %c0_294, %c6] : memref<1x2x358xf32, #tpu.memory_space<vmem>>, vector<1x1x256xf32>
    %633 = vector.shape_cast %632 : vector<1x1x256xf32> to vector<1x256xf32>
    %c0_295 = arith.constant 0 : index
    %c1_296 = arith.constant 1 : index
    %c6_297 = arith.constant 6 : index
    %634 = vector.load %arg5[%c0_295, %c1_296, %c6_297] : memref<1x2x358xf32, #tpu.memory_space<vmem>>, vector<1x1x256xf32>
    %635 = vector.shape_cast %634 : vector<1x1x256xf32> to vector<1x256xf32>
    %c6_298 = arith.constant 6 : index
    %636 = memref.load %arg1[%c6_298] : memref<98xf32, #tpu.memory_space<smem>>
    %c55 = arith.constant 55 : index
    %637 = memref.load %arg1[%c55] : memref<98xf32, #tpu.memory_space<smem>>
    %638 = vector.broadcast %636 : f32 to vector<1x256xf32>
    %639 = arith.mulf %638, %633 : vector<1x256xf32>
    %640 = vector.broadcast %637 : f32 to vector<1x256xf32>
    %641 = arith.mulf %640, %635 : vector<1x256xf32>
    %642 = arith.addf %639, %641 : vector<1x256xf32>
    %643 = arith.addf %631, %642 : vector<1x256xf32>
    %c0_299 = arith.constant 0 : index
    %c0_300 = arith.constant 0 : index
    %c22_301 = arith.constant 22 : index
    %644 = vector.load %arg5[%c0_299, %c0_300, %c22_301] : memref<1x2x358xf32, #tpu.memory_space<vmem>>, vector<1x1x256xf32>
    %645 = vector.shape_cast %644 : vector<1x1x256xf32> to vector<1x256xf32>
    %c0_302 = arith.constant 0 : index
    %c1_303 = arith.constant 1 : index
    %c22_304 = arith.constant 22 : index
    %646 = vector.load %arg5[%c0_302, %c1_303, %c22_304] : memref<1x2x358xf32, #tpu.memory_space<vmem>>, vector<1x1x256xf32>
    %647 = vector.shape_cast %646 : vector<1x1x256xf32> to vector<1x256xf32>
    %c13 = arith.constant 13 : index
    %648 = memref.load %arg1[%c13] : memref<98xf32, #tpu.memory_space<smem>>
    %c62 = arith.constant 62 : index
    %649 = memref.load %arg1[%c62] : memref<98xf32, #tpu.memory_space<smem>>
    %650 = vector.broadcast %648 : f32 to vector<1x256xf32>
    %651 = arith.mulf %650, %645 : vector<1x256xf32>
    %652 = vector.broadcast %649 : f32 to vector<1x256xf32>
    %653 = arith.mulf %652, %647 : vector<1x256xf32>
    %654 = arith.addf %651, %653 : vector<1x256xf32>
    %655 = arith.addf %643, %654 : vector<1x256xf32>
    %c0_305 = arith.constant 0 : index
    %c0_306 = arith.constant 0 : index
    %c38_307 = arith.constant 38 : index
    %656 = vector.load %arg5[%c0_305, %c0_306, %c38_307] : memref<1x2x358xf32, #tpu.memory_space<vmem>>, vector<1x1x256xf32>
    %657 = vector.shape_cast %656 : vector<1x1x256xf32> to vector<1x256xf32>
    %c0_308 = arith.constant 0 : index
    %c1_309 = arith.constant 1 : index
    %c38_310 = arith.constant 38 : index
    %658 = vector.load %arg5[%c0_308, %c1_309, %c38_310] : memref<1x2x358xf32, #tpu.memory_space<vmem>>, vector<1x1x256xf32>
    %659 = vector.shape_cast %658 : vector<1x1x256xf32> to vector<1x256xf32>
    %c20_311 = arith.constant 20 : index
    %660 = memref.load %arg1[%c20_311] : memref<98xf32, #tpu.memory_space<smem>>
    %c69_312 = arith.constant 69 : index
    %661 = memref.load %arg1[%c69_312] : memref<98xf32, #tpu.memory_space<smem>>
    %662 = vector.broadcast %660 : f32 to vector<1x256xf32>
    %663 = arith.mulf %662, %657 : vector<1x256xf32>
    %664 = vector.broadcast %661 : f32 to vector<1x256xf32>
    %665 = arith.mulf %664, %659 : vector<1x256xf32>
    %666 = arith.addf %663, %665 : vector<1x256xf32>
    %667 = arith.addf %655, %666 : vector<1x256xf32>
    %c0_313 = arith.constant 0 : index
    %c0_314 = arith.constant 0 : index
    %c54_315 = arith.constant 54 : index
    %668 = vector.load %arg5[%c0_313, %c0_314, %c54_315] : memref<1x2x358xf32, #tpu.memory_space<vmem>>, vector<1x1x256xf32>
    %669 = vector.shape_cast %668 : vector<1x1x256xf32> to vector<1x256xf32>
    %c0_316 = arith.constant 0 : index
    %c1_317 = arith.constant 1 : index
    %c54_318 = arith.constant 54 : index
    %670 = vector.load %arg5[%c0_316, %c1_317, %c54_318] : memref<1x2x358xf32, #tpu.memory_space<vmem>>, vector<1x1x256xf32>
    %671 = vector.shape_cast %670 : vector<1x1x256xf32> to vector<1x256xf32>
    %c27 = arith.constant 27 : index
    %672 = memref.load %arg1[%c27] : memref<98xf32, #tpu.memory_space<smem>>
    %c76 = arith.constant 76 : index
    %673 = memref.load %arg1[%c76] : memref<98xf32, #tpu.memory_space<smem>>
    %674 = vector.broadcast %672 : f32 to vector<1x256xf32>
    %675 = arith.mulf %674, %669 : vector<1x256xf32>
    %676 = vector.broadcast %673 : f32 to vector<1x256xf32>
    %677 = arith.mulf %676, %671 : vector<1x256xf32>
    %678 = arith.addf %675, %677 : vector<1x256xf32>
    %679 = arith.addf %667, %678 : vector<1x256xf32>
    %c0_319 = arith.constant 0 : index
    %c0_320 = arith.constant 0 : index
    %c70_321 = arith.constant 70 : index
    %680 = vector.load %arg5[%c0_319, %c0_320, %c70_321] : memref<1x2x358xf32, #tpu.memory_space<vmem>>, vector<1x1x256xf32>
    %681 = vector.shape_cast %680 : vector<1x1x256xf32> to vector<1x256xf32>
    %c0_322 = arith.constant 0 : index
    %c1_323 = arith.constant 1 : index
    %c70_324 = arith.constant 70 : index
    %682 = vector.load %arg5[%c0_322, %c1_323, %c70_324] : memref<1x2x358xf32, #tpu.memory_space<vmem>>, vector<1x1x256xf32>
    %683 = vector.shape_cast %682 : vector<1x1x256xf32> to vector<1x256xf32>
    %c34_325 = arith.constant 34 : index
    %684 = memref.load %arg1[%c34_325] : memref<98xf32, #tpu.memory_space<smem>>
    %c83_326 = arith.constant 83 : index
    %685 = memref.load %arg1[%c83_326] : memref<98xf32, #tpu.memory_space<smem>>
    %686 = vector.broadcast %684 : f32 to vector<1x256xf32>
    %687 = arith.mulf %686, %681 : vector<1x256xf32>
    %688 = vector.broadcast %685 : f32 to vector<1x256xf32>
    %689 = arith.mulf %688, %683 : vector<1x256xf32>
    %690 = arith.addf %687, %689 : vector<1x256xf32>
    %691 = arith.addf %679, %690 : vector<1x256xf32>
    %c0_327 = arith.constant 0 : index
    %c0_328 = arith.constant 0 : index
    %c86_329 = arith.constant 86 : index
    %692 = vector.load %arg5[%c0_327, %c0_328, %c86_329] : memref<1x2x358xf32, #tpu.memory_space<vmem>>, vector<1x1x256xf32>
    %693 = vector.shape_cast %692 : vector<1x1x256xf32> to vector<1x256xf32>
    %c0_330 = arith.constant 0 : index
    %c1_331 = arith.constant 1 : index
    %c86_332 = arith.constant 86 : index
    %694 = vector.load %arg5[%c0_330, %c1_331, %c86_332] : memref<1x2x358xf32, #tpu.memory_space<vmem>>, vector<1x1x256xf32>
    %695 = vector.shape_cast %694 : vector<1x1x256xf32> to vector<1x256xf32>
    %c41 = arith.constant 41 : index
    %696 = memref.load %arg1[%c41] : memref<98xf32, #tpu.memory_space<smem>>
    %c90 = arith.constant 90 : index
    %697 = memref.load %arg1[%c90] : memref<98xf32, #tpu.memory_space<smem>>
    %698 = vector.broadcast %696 : f32 to vector<1x256xf32>
    %699 = arith.mulf %698, %693 : vector<1x256xf32>
    %700 = vector.broadcast %697 : f32 to vector<1x256xf32>
    %701 = arith.mulf %700, %695 : vector<1x256xf32>
    %702 = arith.addf %699, %701 : vector<1x256xf32>
    %703 = arith.addf %691, %702 : vector<1x256xf32>
    %c0_333 = arith.constant 0 : index
    %c0_334 = arith.constant 0 : index
    %c102 = arith.constant 102 : index
    %704 = vector.load %arg5[%c0_333, %c0_334, %c102] : memref<1x2x358xf32, #tpu.memory_space<vmem>>, vector<1x1x256xf32>
    %705 = vector.shape_cast %704 : vector<1x1x256xf32> to vector<1x256xf32>
    %c0_335 = arith.constant 0 : index
    %c1_336 = arith.constant 1 : index
    %c102_337 = arith.constant 102 : index
    %706 = vector.load %arg5[%c0_335, %c1_336, %c102_337] : memref<1x2x358xf32, #tpu.memory_space<vmem>>, vector<1x1x256xf32>
    %707 = vector.shape_cast %706 : vector<1x1x256xf32> to vector<1x256xf32>
    %c48_338 = arith.constant 48 : index
    %708 = memref.load %arg1[%c48_338] : memref<98xf32, #tpu.memory_space<smem>>
    %c97_339 = arith.constant 97 : index
    %709 = memref.load %arg1[%c97_339] : memref<98xf32, #tpu.memory_space<smem>>
    %710 = vector.broadcast %708 : f32 to vector<1x256xf32>
    %711 = arith.mulf %710, %705 : vector<1x256xf32>
    %712 = vector.broadcast %709 : f32 to vector<1x256xf32>
    %713 = arith.mulf %712, %707 : vector<1x256xf32>
    %714 = arith.addf %711, %713 : vector<1x256xf32>
    %715 = arith.addf %703, %714 : vector<1x256xf32>
    %716 = arith.mulf %630, %715 : vector<1x256xf32>
    %717 = arith.addf %619, %716 : vector<1x256xf32>
    %c0_340 = arith.constant 0 : index
    %718 = memref.load %arg2[%c0_340] : memref<1xf32, #tpu.memory_space<smem>>
    %719 = vector.broadcast %718 : f32 to vector<1x256xf32>
    %720 = arith.addf %717, %719 : vector<1x256xf32>
    %cst_341 = arith.constant 0.000000e+00 : f32
    %721 = vector.broadcast %cst_341 : f32 to vector<1x256xf32>
    %722 = arith.maximumf %720, %721 : vector<1x256xf32>
    %723 = arith.negf %722 : vector<1x256xf32>
    %724 = math.exp %723 : vector<1x256xf32>
    %cst_342 = arith.constant 1.000000e+00 : f32
    %725 = vector.broadcast %cst_342 : f32 to vector<1x256xf32>
    %726 = arith.addf %725, %724 : vector<1x256xf32>
    %727 = arith.divf %725, %726 : vector<1x256xf32>
    %728 = vector.shape_cast %727 : vector<1x256xf32> to vector<1x1x256xf32>
    %c0_343 = arith.constant 0 : index
    %c0_344 = arith.constant 0 : index
    %c0_345 = arith.constant 0 : index
    %729 = vector.load %arg3[%c0_343, %c0_344, %c0_345] : memref<1x4x256xf32, #tpu.memory_space<vmem>>, vector<1x4x256xf32>
    %730 = vector.broadcast %728 : vector<1x1x256xf32> to vector<1x4x256xf32>
    %731 = arith.mulf %729, %730 : vector<1x4x256xf32>
    %c0_346 = arith.constant 0 : index
    %c0_347 = arith.constant 0 : index
    %c0_348 = arith.constant 0 : index
    %732 = vector.load %arg4[%c0_346, %c0_347, %c0_348] : memref<1x4x256xf32, #tpu.memory_space<vmem>>, vector<1x4x256xf32>
    tpu.vector_store %arg4[%c0_346, %c0_347, %c0_348], %731 {strides = array<i32>} : memref<1x4x256xf32, #tpu.memory_space<vmem>>, vector<1x4x256xf32>,
    return
  }
  func.func @transform_0(%arg0: i32) -> i32 {
    %c0_i32 = arith.constant 0 : i32
    %c0_i32_0 = arith.constant 0 : i32
    return %c0_i32 : i32
  }
  func.func @transform_1(%arg0: i32) -> i32 {
    %c0_i32 = arith.constant 0 : i32
    %c0_i32_0 = arith.constant 0 : i32
    return %c0_i32 : i32
  }
  func.func @transform_2(%arg0: i32) -> (i32, i32, i32) {
    %c0_i32 = arith.constant 0 : i32
    %c0_i32_0 = arith.constant 0 : i32
    %c0_i32_1 = arith.constant 0 : i32
    return %arg0, %c0_i32, %c0_i32_0 : i32, i32, i32
  }
  func.func @transform_3(%arg0: i32) -> (i32, i32, i32) {
    %c0_i32 = arith.constant 0 : i32
    %c0_i32_0 = arith.constant 0 : i32
    %c0_i32_1 = arith.constant 0 : i32
    return %arg0, %c0_i32, %c0_i32_0 : i32, i32, i32
  }
}

</mosaic_0001>

<llo_original>
// kernel: tpu_custom_call.1
$region0: #{tpu_custom_call.1}
  #allocation0 [shape = 'u32[]', space=smem, size = 0x4, offset = 0x4, fixed_abs, tag = 'smem constant byte address 0x4 - core index']
  #allocation1 [shape = 'u32[72,128]{1,0:T(1,128)}', space=vmem, size = 0x9000, scoped, tag = 'internal scratch']
  #allocation2 [shape = 'f32[1,2,358]{2,1,0:T(2,128)}', space=vmem, size = 0xc00, scoped, tag = 'scratch operand']
  #allocation3 [shape = 'f32[1]{0:T(128)S(6)}', space=smem, size = 0x200, scoped, tag = 'scoped memory for tpu_custom_call.1']
  %s0 = inlined_call_operand.vmem [shape: f32[98], index: 0, kind: input, shape index: {}]
  %s1 = inlined_call_operand.<no memory space> [shape: f32[1], index: 1, kind: input, shape index: {}]
  %s2 = inlined_call_operand.hbm [shape: f32[2,4,256], index: 2, kind: input, shape index: {}, may-alias: {2,3}]
  %s3 = inlined_call_operand.hbm [shape: f32[2,4,256], index: 3, kind: output, shape index: {}, may-alias: {2,3}]
  %s4 = sld [smem:[#allocation0]]
  $region53: #{tpu_custom_call.1} parent=0
    _
  %s6 = ssub.s32 1, %s4
  %s7 = scalar_select 0, %s6, %s4
  %8 = sst [smem:[#allocation3]] %s1
  $region1: #{tpu_custom_call.1} parent=0
    #allocation4 [shape = 'u8[512]{0}', space=smem, size = 0x200, scoped, tag = 'input window, operand 0, single buffered']
    #allocation5 [shape = 's32[2]{0}', space=sflag, size = 0x8, scoped, tag = 'scoped memory for tpu_custom_call.1']
    #allocation6 [shape = 's32[2]{0}', space=sflag, size = 0x8, scoped, tag = 'scoped memory for tpu_custom_call.1']
    #allocation7 [shape = 's32[2]{0}', space=sflag, size = 0x8, scoped, tag = 'scoped memory for tpu_custom_call.1']
    #allocation8 [shape = 'u8[8192]{0}', space=vmem, size = 0x2000, scoped, tag = 'input window, operand 2']
    #allocation9 [shape = 'u8[8192]{0}', space=vmem, size = 0x2000, scoped, tag = 'output window, operand 0']
    %9 = vsyncpa [#allocation7], 0
    %10 = vsyncpa [#allocation5], 0
    %s11 = scalar_lea.sflag [#allocation5], 1
    %12 = vsyncpa %s11, 0
    %13 = vsyncpa [#allocation6], 0
    %s14 = scalar_lea.sflag [#allocation6], 1
    %15 = vsyncpa %s14, 0
    loop: start=0, step=1, limit=4
    $region2: #{tpu_custom_call.1} parent=1 // loop_pre_header
      _
    $region3: #{tpu_custom_call.1} parent=1 // loop_header
      %s17 = sphi 0, %s21
      %p18 = scmp.ge.s32.totalorder %s17, 4
      %s25 = sphi 0, %s25
      %s27 = sphi 0, %s25
      %s28 = sphi 0, %s27
      %s42 = sphi 0, %s28
      %s46 = sphi 0, %s46
      %s48 = sphi 0, %s46
      %s49 = sphi 0, %s48
      %s63 = sphi 0, %s49
      %s69 = sphi 0, %s71
      %s72 = sphi 0, %s69
      %s73 = sphi 0, %s72
      %s89 = sphi 0, %s73
      %s95 = sphi 0, %s97
      %s98 = sphi 0, %s95
      %s99 = sphi 0, %s98
      %s115 = sphi 0, %s99
    $region4: #{tpu_custom_call.1} parent=1 // loop_header_branch
      %20 = sbr.rel (%p18) target = $region8
    $region5: #{tpu_custom_call.1} parent=1 // loop_body
      %s22 = ssub.s32 %s17, 1
      %s23 = ssub.s32 %s17, 2
      %s24 = sadd.s32 %s17, 1
      %s26 = sadd.s32 %s25, 1
      %p29 = scmp.eq.s32.totalorder %s17, 1
      %p30 = scmp.ne.s32.totalorder %s25, %s27
      %p31 = scmp.eq.s32.totalorder %s17, 0
      %p32 = por %p30, %p31
      %p33 = scmp.ne.s32.totalorder %s25, %s27
      %p34 = scmp.eq.s32.totalorder %s22, 1
      %p35 = por %p33, %p34
      %p36 = scmp.ne.s32.totalorder %s27, %s28
      %p37 = scmp.eq.s32.totalorder %s22, 0
      %p38 = por %p36, %p37
      %p39 = scmp.ne.s32.totalorder %s27, %s28
      %p40 = scmp.eq.s32.totalorder %s23, 1
      %p41 = por %p39, %p40
      %p43 = scmp.ne.s32.totalorder %s28, %s42
      %p44 = scmp.eq.s32.totalorder %s23, 0
      %p45 = por %p43, %p44
      %s47 = sadd.s32 %s46, 1
      %p50 = scmp.eq.s32.totalorder %s17, 1
      %p51 = scmp.ne.s32.totalorder %s46, %s48
      %p52 = scmp.eq.s32.totalorder %s17, 0
      %p53 = por %p51, %p52
      %p54 = scmp.ne.s32.totalorder %s46, %s48
      %p55 = scmp.eq.s32.totalorder %s22, 1
      %p56 = por %p54, %p55
      %p57 = scmp.ne.s32.totalorder %s48, %s49
      %p58 = scmp.eq.s32.totalorder %s22, 0
      %p59 = por %p57, %p58
      %p60 = scmp.ne.s32.totalorder %s48, %s49
      %p61 = scmp.eq.s32.totalorder %s23, 1
      %p62 = por %p60, %p61
      %p64 = scmp.ne.s32.totalorder %s49, %s63
      %p65 = scmp.eq.s32.totalorder %s23, 0
      %p66 = por %p64, %p65
      %s67 = ssub.s32 %s17, %s24
      %p68 = scmp.eq.s32.totalorder %s67, 0
      %s70 = sadd.s32 %s69, 1
      %s71 = scalar_select %p68, %s69, %s70
      %p74 = pneg %p68
      %p75 = scmp.eq.s32.totalorder %s17, 1
      %p76 = por %p74, %p75
      %p77 = scmp.ne.s32.totalorder %s69, %s72
      %p78 = scmp.eq.s32.totalorder %s17, 0
      %p79 = por %p77, %p78
      %p80 = scmp.ne.s32.totalorder %s69, %s72
      %p81 = scmp.eq.s32.totalorder %s22, 1
      %p82 = por %p80, %p81
      %p83 = scmp.ne.s32.totalorder %s72, %s73
      %p84 = scmp.eq.s32.totalorder %s22, 0
      %p85 = por %p83, %p84
      %p86 = scmp.ne.s32.totalorder %s72, %s73
      %p87 = scmp.eq.s32.totalorder %s23, 1
      %p88 = por %p86, %p87
      %p90 = scmp.ne.s32.totalorder %s73, %s89
      %p91 = scmp.eq.s32.totalorder %s23, 0
      %p92 = por %p90, %p91
      %s93 = ssub.s32 %s17, %s24
      %p94 = scmp.eq.s32.totalorder %s93, 0
      %s96 = sadd.s32 %s95, 1
      %s97 = scalar_select %p94, %s95, %s96
      %p100 = pneg %p94
      %p101 = scmp.eq.s32.totalorder %s17, 1
      %p102 = por %p100, %p101
      %p103 = scmp.ne.s32.totalorder %s95, %s98
      %p104 = scmp.eq.s32.totalorder %s17, 0
      %p105 = por %p103, %p104
      %p106 = scmp.ne.s32.totalorder %s95, %s98
      %p107 = scmp.eq.s32.totalorder %s22, 1
      %p108 = por %p106, %p107
      %p109 = scmp.ne.s32.totalorder %s98, %s99
      %p110 = scmp.eq.s32.totalorder %s22, 0
      %p111 = por %p109, %p110
      %p112 = scmp.ne.s32.totalorder %s98, %s99
      %p113 = scmp.eq.s32.totalorder %s23, 1
      %p114 = por %p112, %p113
      %p116 = scmp.ne.s32.totalorder %s99, %s115
      %p117 = scmp.eq.s32.totalorder %s23, 0
      %p118 = por %p116, %p117
      %p119 = scmp.le.s32.totalorder 1, %s17
      %p120 = scmp.lt.s32.totalorder %s17, 3
      %p121 = pnand %p119, %p120
      %p122 = pneg %p121
      // Predicated region
      $region9: #{tpu_custom_call.1} parent=5 // pred_check
        _
      $region10: #{tpu_custom_call.1} parent=5 // pred_check_branch
        %124 = sbr.rel (%p121) target = $region12
      $region11: #{tpu_custom_call.1} parent=5 // pred_region
        %s125 = ssub.s32 %s17, 1
        // Predicated region
        $region13: #{tpu_custom_call.1} parent=11 // pred_check
          %p126 = pneg %p38
        $region14: #{tpu_custom_call.1} parent=11 // pred_check_branch
          %128 = sbr.rel (%p126) target = $region16
        $region15: #{tpu_custom_call.1} parent=11 // pred_region
          %130 = vsyncadd [#allocation7], 0
          %s132 = sshll.u32 %s0, 4
          %s133 = int_to_ptr.vmem [resolvable:$true] %s132
          %135 = dma.vmem_to_smem %s133, 16, [#allocation4], [#allocation7]
        $region16: #{tpu_custom_call.1} parent=11 // pred_fallthru
          _
        // Predicated region
        $region17: #{tpu_custom_call.1} parent=11 // pred_check
          %p136 = pneg %p59
        $region18: #{tpu_custom_call.1} parent=11 // pred_check_branch
          %138 = sbr.rel (%p136) target = $region20
        $region19: #{tpu_custom_call.1} parent=11 // pred_region
          _
        $region20: #{tpu_custom_call.1} parent=11 // pred_fallthru
          _
      $region12: #{tpu_custom_call.1} parent=5 // pred_fallthru
        _
      %p139 = scmp.lt.s32.totalorder %s17, 2
      // Predicated region
      $region21: #{tpu_custom_call.1} parent=5 // pred_check
        %p140 = pneg %p139
      $region22: #{tpu_custom_call.1} parent=5 // pred_check_branch
        %142 = sbr.rel (%p140) target = $region24
      $region23: #{tpu_custom_call.1} parent=5 // pred_region
        // Predicated region
        $region25: #{tpu_custom_call.1} parent=23 // pred_check
          %p143 = pneg %p79
        $region26: #{tpu_custom_call.1} parent=23 // pred_check_branch
          %145 = sbr.rel (%p143) target = $region28
        $region27: #{tpu_custom_call.1} parent=23 // pred_region
          %s146 = sand.u32 %s69, 1
          %s147 = scalar_lea.sflag [#allocation5], %s146
          %s148 = sand.u32 %s69, 1
          %s149 = smul.addr %s148, 8
          %s150 = scalar_lea.vmem [#allocation8], %s149
          %152 = vsyncadd %s147, 0
          %s153 = smul.addr %s17, 2
          %s154 = smul.addr %s153, 4
          %s155 = scalar_lea.hbm %s2, %s154
          %s157 = sshll.u32 %s155, 4
          %s158 = int_to_ptr.hbm [resolvable:$true] %s157
          %s159 = sshll.u32 %s150, 4
          %s160 = int_to_ptr.vmem [resolvable:$true] %s159
          %162 = dma.hbm_to_vmem [thread:$0]  %s158, 128, %s160, %s147
        $region28: #{tpu_custom_call.1} parent=23 // pred_fallthru
          _
      $region24: #{tpu_custom_call.1} parent=5 // pred_fallthru
        _
      %p163 = scmp.le.s32.totalorder 1, %s17
      %p164 = scmp.lt.s32.totalorder %s17, 3
      %p165 = pnand %p163, %p164
      %p166 = pneg %p165
      // Predicated region
      $region29: #{tpu_custom_call.1} parent=5 // pred_check
        _
      $region30: #{tpu_custom_call.1} parent=5 // pred_check_branch
        %168 = sbr.rel (%p165) target = $region32
      $region31: #{tpu_custom_call.1} parent=5 // pred_region
        %s169 = ssub.s32 %s17, 1
        // Predicated region
        $region33: #{tpu_custom_call.1} parent=31 // pred_check
          %p170 = pneg %p38
        $region34: #{tpu_custom_call.1} parent=31 // pred_check_branch
          %172 = sbr.rel (%p170) target = $region36
        $region35: #{tpu_custom_call.1} parent=31 // pred_region
          %174 = dma.done [#allocation7], 16
        $region36: #{tpu_custom_call.1} parent=31 // pred_fallthru
          _
        %s175 = sand.u32 %s72, 1
        %s176 = scalar_lea.sflag [#allocation5], %s175
        %s177 = sand.u32 %s72, 1
        %s178 = smul.addr %s177, 8
        %s179 = scalar_lea.vmem [#allocation8], %s178
        // Predicated region
        $region37: #{tpu_custom_call.1} parent=31 // pred_check
          %p180 = pneg %p85
        $region38: #{tpu_custom_call.1} parent=31 // pred_check_branch
          %182 = sbr.rel (%p180) target = $region40
        $region39: #{tpu_custom_call.1} parent=31 // pred_region
          %184 = dma.done %s176, 128
        $region40: #{tpu_custom_call.1} parent=31 // pred_fallthru
          _
        %185 = sfence
        %p186 = pneg %p38
        %p187 = pneg %p35
        %p188 = pneg %p59
        %p189 = pneg %p56
        %s190 = sand.u32 %s72, 1
        %s191 = scalar_lea.sflag [#allocation5], %s190
        %s192 = sand.u32 %s72, 1
        %s193 = smul.addr %s192, 8
        %s194 = scalar_lea.vmem [#allocation8], %s193
        %p195 = pneg %p85
        %p196 = pneg %p82
        %p197 = pneg %p111
        %p198 = pneg %p108
        %s199 = sand.u32 %s98, 1
        %s200 = scalar_lea.sflag [#allocation6], %s199
        %s201 = sand.u32 %s98, 1
        %s202 = smul.addr %s201, 8
        %s203 = scalar_lea.vmem [#allocation9], %s202
        %vm204 = vcmask 410624
        %205 = vst.msk [vmem:[#allocation2] sm:$0x3] %vm204, 0.0
        %vm206 = vcmask 828824
        %207 = vst.msk [vmem:[#allocation2 + $0x4] sm:$0x3] %vm206, 0.0
        %v208 = vld [vmem:[%s179] sm:$0xff]
        %210 = vst [vmem:[#allocation1] ss:$2 sm:$0xff] %v208
        %v211 = vld.sshfl [vmem:[#allocation1] sm:$0xff pattern:$0x75316420]
        %v212 = vld.sshfl [vmem:[#allocation1 + $0x8] sm:$0xff pattern:$0x75316420]
        %vm215 = vcmask 1043456
        %v216 = vsel %vm215, %v211, -inf
        %v217 = vrot.slane %v216, 4
        %v218 = vmax.f32 %v216, %v217
        %v219 = vrot.slane %v218, 2
        %v220 = vmax.f32 %v218, %v219
        %v221 = vrot.slane %v220, 1
        %v222 = vmax.f32 %v220, %v221
        %v223 = vsel %vm215, %v212, -inf
        %v224 = vrot.slane %v223, 4
        %v225 = vmax.f32 %v223, %v224
        %v226 = vrot.slane %v225, 2
        %v227 = vmax.f32 %v225, %v226
        %v228 = vrot.slane %v227, 1
        %v229 = vmax.f32 %v227, %v228
        %230 = vst [vmem:[#allocation1] ss:$2 sm:$0xff] %v208
        %v231 = vld.sshfl [vmem:[#allocation1] sm:$0xff pattern:$0x75316420]
        %v232 = vld.sshfl [vmem:[#allocation1 + $0x8] sm:$0xff pattern:$0x75316420]
        %v235 = vsel %vm215, %v231, 0.0
        %v236 = vrot.slane %v235, 4
        %v237 = vadd.f32 %v235, %v236
        %v238 = vrot.slane %v237, 2
        %v239 = vadd.f32 %v237, %v238
        %v240 = vrot.slane %v239, 1
        %v241 = vadd.f32 %v239, %v240
        %v242 = vsel %vm215, %v232, 0.0
        %v243 = vrot.slane %v242, 4
        %v244 = vadd.f32 %v242, %v243
        %v245 = vrot.slane %v244, 2
        %v246 = vadd.f32 %v244, %v245
        %v247 = vrot.slane %v246, 1
        %v248 = vadd.f32 %v246, %v247
        %v251 = vrot.slane %v229, 7
        %vm252 = vcmask 1040384
        %v253 = vsel %vm252, %v222, %v251
        %254 = vrot.lane.b32.xlu0 %v253, 51
        %v255 = vpop.permute.xlu0 %254
        %v256 = vrot.slane %v255, 7
        %vm257 = vcmask 416768
        %v258 = vsel %vm257, %v256, %v255
        %v260 = vlaneseq
        %vm261 = vcmp.ge.s32.totalorder %v260, 51
        %vm262 = vcmp.lt.s32.totalorder %v260, 307
        %vm263 = vmand %vm261, %vm262
        %264 = vst.msk [vmem:[#allocation2] ss:$2 sm:$0x7] %vm263, %v258
        %v265 = vmul.f32 %v241, 0.25
        %v266 = vmul.f32 %v248, 0.25
        %v269 = vrot.slane %v266, 7
        %v270 = vsel %vm252, %v265, %v269
        %271 = vrot.lane.b32.xlu0 %v270, 51
        %v272 = vpop.permute.xlu0 %271
        %v273 = vrot.slane %v272, 7
        %v274 = vsel %vm257, %v273, %v272
        %s276 = scalar_lea.vmem [#allocation2], 1
        %277 = vst.msk [vmem:[%s276] ss:$2 sm:$0x7] %vm263, %v274
        %v278 = vlaneseq
        %v279 = vand.u32 %v278, 127
        %v280 = vadd.s32 %v279, 128
        %vm281 = vcmp.lt.s32.totalorder %v279, 0
        %v282 = vsub.s32 0, %v279
        %v283 = vsel %vm281, %v282, %v279
        %v284 = vshrl.u32 %v283, 4
        %v285 = vand.u32 %v283, 15
        %v286 = vsub.s32 0, %v285
        %v287 = vsel %vm281, %v286, %v285
        %vm288 = vcmp.lt.s32.totalorder %v280, 0
        %v289 = vsub.s32 0, %v280
        %v290 = vsel %vm288, %v289, %v280
        %v291 = vshrl.u32 %v290, 4
        %v292 = vand.u32 %v290, 15
        %v293 = vsub.s32 0, %v292
        %v294 = vsel %vm288, %v293, %v292
        %vm295 = vcmp.ne.s32.totalorder %v287, 0
        %vm296 = vcmp.ne.s32.totalorder %v294, 0
        %vm297 = vcmp.lt.s32.totalorder %v287, 0
        %vm298 = vcmp.lt.s32.totalorder %v294, 0
        %vm299 = vmand %vm297, %vm295
        %vm300 = vmand %vm298, %vm296
        %v301 = vadd.s32 %v287, 16
        %v302 = vadd.s32 %v294, 16
        %v303 = vsel %vm299, %v301, %v287
        %v304 = vsel %vm300, %v302, %v294
        %v305 = vadd.s32 %v303, 4294967293
        %v306 = vadd.s32 %v304, 4294967293
        %vm307 = vcmp.ge.s32.totalorder %v305, 0
        %vm308 = vcmp.ge.s32.totalorder %v306, 0
        %vm309 = vcmp.lt.s32.totalorder %v305, 16
        %vm310 = vcmp.lt.s32.totalorder %v306, 16
        %vm311 = vmand %vm307, %vm309
        %vm312 = vmand %vm308, %vm310
        %v313 = vsel %vm311, 1, 0
        %v314 = vsel %vm312, 1, 0
        %v315 = vcvt.s32.f32 %v313
        %v316 = vcvt.s32.f32 %v314
        %v317 = vld [vmem:[#allocation2] ss:$2 sm:$0x3]
        %v318 = vld [vmem:[%s276] ss:$2 sm:$0x3]
        %s319 = sld [smem:[#allocation4]]
        %s320 = sld [smem:[#allocation4 + $0x31]]
        %v321 = vstv %s319
        %v322 = vmul.f32 %v321, %v317
        %v323 = vstv %s320
        %v324 = vmul.f32 %v323, %v318
        %v325 = vadd.f32 %v322, %v324
        %v326 = vadd.f32 %v325, 0.0
        %v327 = vld [vmem:[#allocation2] ss:$2 sm:$0x7]
        %v328 = vld [vmem:[%s276] ss:$2 sm:$0x7]
        %s329 = sld [smem:[#allocation4 + $0x7]]
        %s330 = sld [smem:[#allocation4 + $0x38]]
        %v331 = vstv %s329
        %v332 = vmul.f32 %v331, %v327
        %v333 = vstv %s330
        %v334 = vmul.f32 %v333, %v328
        %v335 = vadd.f32 %v332, %v334
        %337 = vrot.lane.b32.xlu0 %v335, 112
        %v338 = vpop.permute.xlu0 %337
        %v339 = vrot.slane %v338, 1
        %vm340 = vcmask 916480
        %v341 = vsel %vm340, %v338, %v339
        %v343 = vadd.f32 %v326, %v341
        %s344 = sld [smem:[#allocation4 + $0xe]]
        %s345 = sld [smem:[#allocation4 + $0x3f]]
        %v346 = vstv %s344
        %v347 = vmul.f32 %v346, %v327
        %v348 = vstv %s345
        %v349 = vmul.f32 %v348, %v328
        %v350 = vadd.f32 %v347, %v349
        %352 = vrot.lane.b32.xlu0 %v350, 96
        %v353 = vpop.permute.xlu0 %352
        %v354 = vrot.slane %v353, 1
        %vm355 = vcmask 785408
        %v356 = vsel %vm355, %v353, %v354
        %v358 = vadd.f32 %v343, %v356
        %s359 = sld [smem:[#allocation4 + $0x15]]
        %s360 = sld [smem:[#allocation4 + $0x46]]
        %v361 = vstv %s359
        %v362 = vmul.f32 %v361, %v327
        %v363 = vstv %s360
        %v364 = vmul.f32 %v363, %v328
        %v365 = vadd.f32 %v362, %v364
        %367 = vrot.lane.b32.xlu0 %v365, 80
        %v368 = vpop.permute.xlu0 %367
        %v369 = vrot.slane %v368, 1
        %vm370 = vcmask 654336
        %v371 = vsel %vm370, %v368, %v369
        %v373 = vadd.f32 %v358, %v371
        %s374 = sld [smem:[#allocation4 + $0x1c]]
        %s375 = sld [smem:[#allocation4 + $0x4d]]
        %v376 = vstv %s374
        %v377 = vmul.f32 %v376, %v327
        %v378 = vstv %s375
        %v379 = vmul.f32 %v378, %v328
        %v380 = vadd.f32 %v377, %v379
        %382 = vrot.lane.b32.xlu0 %v380, 64
        %v383 = vpop.permute.xlu0 %382
        %v384 = vrot.slane %v383, 1
        %vm385 = vcmask 523264
        %v386 = vsel %vm385, %v383, %v384
        %v388 = vadd.f32 %v373, %v386
        %s389 = sld [smem:[#allocation4 + $0x23]]
        %s390 = sld [smem:[#allocation4 + $0x54]]
        %v391 = vstv %s389
        %v392 = vmul.f32 %v391, %v327
        %v393 = vstv %s390
        %v394 = vmul.f32 %v393, %v328
        %v395 = vadd.f32 %v392, %v394
        %397 = vrot.lane.b32.xlu0 %v395, 48
        %v398 = vpop.permute.xlu0 %397
        %v399 = vrot.slane %v398, 1
        %vm400 = vcmask 392192
        %v401 = vsel %vm400, %v398, %v399
        %v403 = vadd.f32 %v388, %v401
        %s404 = sld [smem:[#allocation4 + $0x2a]]
        %s405 = sld [smem:[#allocation4 + $0x5b]]
        %v406 = vstv %s404
        %v407 = vmul.f32 %v406, %v327
        %v408 = vstv %s405
        %v409 = vmul.f32 %v408, %v328
        %v410 = vadd.f32 %v407, %v409
        %412 = vrot.lane.b32.xlu0 %v410, 32
        %v413 = vpop.permute.xlu0 %412
        %v414 = vrot.slane %v413, 1
        %vm415 = vcmask 261120
        %v416 = vsel %vm415, %v413, %v414
        %v418 = vadd.f32 %v403, %v416
        %v420 = vperm.slane %v418, 0
        %v421 = vperm.slane %v418, 1
        %v424 = vmul.f32 %v315, %v420
        %v425 = vmul.f32 %v316, %v421
        %v426 = vadd.f32 %v424, 0.0
        %v427 = vadd.f32 %v425, 0.0
        %v428 = vadd.s32 %v303, 4294967294
        %v429 = vadd.s32 %v304, 4294967294
        %vm430 = vcmp.ge.s32.totalorder %v428, 0
        %vm431 = vcmp.ge.s32.totalorder %v429, 0
        %vm432 = vcmp.lt.s32.totalorder %v428, 16
        %vm433 = vcmp.lt.s32.totalorder %v429, 16
        %vm434 = vmand %vm430, %vm432
        %vm435 = vmand %vm431, %vm433
        %v436 = vsel %vm434, 1, 0
        %v437 = vsel %vm435, 1, 0
        %v438 = vcvt.s32.f32 %v436
        %v439 = vcvt.s32.f32 %v437
        %s440 = sld [smem:[#allocation4 + $0x1]]
        %s441 = sld [smem:[#allocation4 + $0x32]]
        %v442 = vstv %s440
        %v443 = vmul.f32 %v442, %v327
        %v444 = vstv %s441
        %v445 = vmul.f32 %v444, %v328
        %v446 = vadd.f32 %v443, %v445
        %v447 = vadd.f32 %v446, 0.0
        %s448 = sld [smem:[#allocation4 + $0x8]]
        %s449 = sld [smem:[#allocation4 + $0x39]]
        %v450 = vstv %s448
        %v451 = vmul.f32 %v450, %v327
        %v452 = vstv %s449
        %v453 = vmul.f32 %v452, %v328
        %v454 = vadd.f32 %v451, %v453
        %456 = vrot.lane.b32.xlu0 %v454, 112
        %v457 = vpop.permute.xlu0 %456
        %v458 = vrot.slane %v457, 1
        %v459 = vsel %vm340, %v457, %v458
        %v461 = vadd.f32 %v447, %v459
        %s462 = sld [smem:[#allocation4 + $0xf]]
        %s463 = sld [smem:[#allocation4 + $0x40]]
        %v464 = vstv %s462
        %v465 = vmul.f32 %v464, %v327
        %v466 = vstv %s463
        %v467 = vmul.f32 %v466, %v328
        %v468 = vadd.f32 %v465, %v467
        %470 = vrot.lane.b32.xlu0 %v468, 96
        %v471 = vpop.permute.xlu0 %470
        %v472 = vrot.slane %v471, 1
        %v473 = vsel %vm355, %v471, %v472
        %v475 = vadd.f32 %v461, %v473
        %s476 = sld [smem:[#allocation4 + $0x16]]
        %s477 = sld [smem:[#allocation4 + $0x47]]
        %v478 = vstv %s476
        %v479 = vmul.f32 %v478, %v327
        %v480 = vstv %s477
        %v481 = vmul.f32 %v480, %v328
        %v482 = vadd.f32 %v479, %v481
        %484 = vrot.lane.b32.xlu0 %v482, 80
        %v485 = vpop.permute.xlu0 %484
        %v486 = vrot.slane %v485, 1
        %v487 = vsel %vm370, %v485, %v486
        %v489 = vadd.f32 %v475, %v487
        %s490 = sld [smem:[#allocation4 + $0x1d]]
        %s491 = sld [smem:[#allocation4 + $0x4e]]
        %v492 = vstv %s490
        %v493 = vmul.f32 %v492, %v327
        %v494 = vstv %s491
        %v495 = vmul.f32 %v494, %v328
        %v496 = vadd.f32 %v493, %v495
        %498 = vrot.lane.b32.xlu0 %v496, 64
        %v499 = vpop.permute.xlu0 %498
        %v500 = vrot.slane %v499, 1
        %v501 = vsel %vm385, %v499, %v500
        %v503 = vadd.f32 %v489, %v501
        %s504 = sld [smem:[#allocation4 + $0x24]]
        %s505 = sld [smem:[#allocation4 + $0x55]]
        %v506 = vstv %s504
        %v507 = vmul.f32 %v506, %v327
        %v508 = vstv %s505
        %v509 = vmul.f32 %v508, %v328
        %v510 = vadd.f32 %v507, %v509
        %512 = vrot.lane.b32.xlu0 %v510, 48
        %v513 = vpop.permute.xlu0 %512
        %v514 = vrot.slane %v513, 1
        %v515 = vsel %vm400, %v513, %v514
        %v517 = vadd.f32 %v503, %v515
        %s518 = sld [smem:[#allocation4 + $0x2b]]
        %s519 = sld [smem:[#allocation4 + $0x5c]]
        %v520 = vstv %s518
        %v521 = vmul.f32 %v520, %v327
        %v522 = vstv %s519
        %v523 = vmul.f32 %v522, %v328
        %v524 = vadd.f32 %v521, %v523
        %526 = vrot.lane.b32.xlu0 %v524, 32
        %v527 = vpop.permute.xlu0 %526
        %v528 = vrot.slane %v527, 1
        %v529 = vsel %vm415, %v527, %v528
        %v531 = vadd.f32 %v517, %v529
        %v533 = vperm.slane %v531, 0
        %v534 = vperm.slane %v531, 1
        %v535 = vperm.slane %v531, 2
        %536 = vrot.lane.b32.xlu0 %v533, 127
        %v537 = vpop.permute.xlu0 %536
        %538 = vrot.lane.b32.xlu0 %v534, 127
        %v539 = vpop.permute.xlu0 %538
        %540 = vrot.lane.b32.xlu0 %v535, 127
        %v541 = vpop.permute.xlu0 %540
        %vm542 = vcmask 1039360
        %v543 = vsel %vm542, %v537, %v539
        %v544 = vsel %vm542, %v539, %v541
        %v547 = vmul.f32 %v438, %v543
        %v548 = vmul.f32 %v439, %v544
        %v549 = vadd.f32 %v426, %v547
        %v550 = vadd.f32 %v427, %v548
        %v551 = vadd.s32 %v303, 4294967295
        %v552 = vadd.s32 %v304, 4294967295
        %vm553 = vcmp.ge.s32.totalorder %v551, 0
        %vm554 = vcmp.ge.s32.totalorder %v552, 0
        %vm555 = vcmp.lt.s32.totalorder %v551, 16
        %vm556 = vcmp.lt.s32.totalorder %v552, 16
        %vm557 = vmand %vm553, %vm555
        %vm558 = vmand %vm554, %vm556
        %v559 = vsel %vm557, 1, 0
        %v560 = vsel %vm558, 1, 0
        %v561 = vcvt.s32.f32 %v559
        %v562 = vcvt.s32.f32 %v560
        %s563 = sld [smem:[#allocation4 + $0x2]]
        %s564 = sld [smem:[#allocation4 + $0x33]]
        %v565 = vstv %s563
        %v566 = vmul.f32 %v565, %v327
        %v567 = vstv %s564
        %v568 = vmul.f32 %v567, %v328
        %v569 = vadd.f32 %v566, %v568
        %v570 = vadd.f32 %v569, 0.0
        %s571 = sld [smem:[#allocation4 + $0x9]]
        %s572 = sld [smem:[#allocation4 + $0x3a]]
        %v573 = vstv %s571
        %v574 = vmul.f32 %v573, %v327
        %v575 = vstv %s572
        %v576 = vmul.f32 %v575, %v328
        %v577 = vadd.f32 %v574, %v576
        %579 = vrot.lane.b32.xlu0 %v577, 112
        %v580 = vpop.permute.xlu0 %579
        %v581 = vrot.slane %v580, 1
        %v582 = vsel %vm340, %v580, %v581
        %v584 = vadd.f32 %v570, %v582
        %s585 = sld [smem:[#allocation4 + $0x10]]
        %s586 = sld [smem:[#allocation4 + $0x41]]
        %v587 = vstv %s585
        %v588 = vmul.f32 %v587, %v327
        %v589 = vstv %s586
        %v590 = vmul.f32 %v589, %v328
        %v591 = vadd.f32 %v588, %v590
        %593 = vrot.lane.b32.xlu0 %v591, 96
        %v594 = vpop.permute.xlu0 %593
        %v595 = vrot.slane %v594, 1
        %v596 = vsel %vm355, %v594, %v595
        %v598 = vadd.f32 %v584, %v596
        %s599 = sld [smem:[#allocation4 + $0x17]]
        %s600 = sld [smem:[#allocation4 + $0x48]]
        %v601 = vstv %s599
        %v602 = vmul.f32 %v601, %v327
        %v603 = vstv %s600
        %v604 = vmul.f32 %v603, %v328
        %v605 = vadd.f32 %v602, %v604
        %607 = vrot.lane.b32.xlu0 %v605, 80
        %v608 = vpop.permute.xlu0 %607
        %v609 = vrot.slane %v608, 1
        %v610 = vsel %vm370, %v608, %v609
        %v612 = vadd.f32 %v598, %v610
        %s613 = sld [smem:[#allocation4 + $0x1e]]
        %s614 = sld [smem:[#allocation4 + $0x4f]]
        %v615 = vstv %s613
        %v616 = vmul.f32 %v615, %v327
        %v617 = vstv %s614
        %v618 = vmul.f32 %v617, %v328
        %v619 = vadd.f32 %v616, %v618
        %621 = vrot.lane.b32.xlu0 %v619, 64
        %v622 = vpop.permute.xlu0 %621
        %v623 = vrot.slane %v622, 1
        %v624 = vsel %vm385, %v622, %v623
        %v626 = vadd.f32 %v612, %v624
        %s627 = sld [smem:[#allocation4 + $0x25]]
        %s628 = sld [smem:[#allocation4 + $0x56]]
        %v629 = vstv %s627
        %v630 = vmul.f32 %v629, %v327
        %v631 = vstv %s628
        %v632 = vmul.f32 %v631, %v328
        %v633 = vadd.f32 %v630, %v632
        %635 = vrot.lane.b32.xlu0 %v633, 48
        %v636 = vpop.permute.xlu0 %635
        %v637 = vrot.slane %v636, 1
        %v638 = vsel %vm400, %v636, %v637
        %v640 = vadd.f32 %v626, %v638
        %s641 = sld [smem:[#allocation4 + $0x2c]]
        %s642 = sld [smem:[#allocation4 + $0x5d]]
        %v643 = vstv %s641
        %v644 = vmul.f32 %v643, %v327
        %v645 = vstv %s642
        %v646 = vmul.f32 %v645, %v328
        %v647 = vadd.f32 %v644, %v646
        %649 = vrot.lane.b32.xlu0 %v647, 32
        %v650 = vpop.permute.xlu0 %649
        %v651 = vrot.slane %v650, 1
        %v652 = vsel %vm415, %v650, %v651
        %v654 = vadd.f32 %v640, %v652
        %v656 = vperm.slane %v654, 0
        %v657 = vperm.slane %v654, 1
        %v658 = vperm.slane %v654, 2
        %659 = vrot.lane.b32.xlu0 %v656, 126
        %v660 = vpop.permute.xlu0 %659
        %661 = vrot.lane.b32.xlu0 %v657, 126
        %v662 = vpop.permute.xlu0 %661
        %663 = vrot.lane.b32.xlu0 %v658, 126
        %v664 = vpop.permute.xlu0 %663
        %vm665 = vcmask 1031168
        %v666 = vsel %vm665, %v660, %v662
        %v667 = vsel %vm665, %v662, %v664
        %v670 = vmul.f32 %v561, %v666
        %v671 = vmul.f32 %v562, %v667
        %v672 = vadd.f32 %v549, %v670
        %v673 = vadd.f32 %v550, %v671
        %vm674 = vcmp.ge.s32.totalorder %v303, 0
        %vm675 = vcmp.ge.s32.totalorder %v304, 0
        %vm676 = vcmp.lt.s32.totalorder %v303, 16
        %vm677 = vcmp.lt.s32.totalorder %v304, 16
        %vm678 = vmand %vm674, %vm676
        %vm679 = vmand %vm675, %vm677
        %v680 = vsel %vm678, 1, 0
        %v681 = vsel %vm679, 1, 0
        %v682 = vcvt.s32.f32 %v680
        %v683 = vcvt.s32.f32 %v681
        %s684 = sld [smem:[#allocation4 + $0x3]]
        %s685 = sld [smem:[#allocation4 + $0x34]]
        %v686 = vstv %s684
        %v687 = vmul.f32 %v686, %v327
        %v688 = vstv %s685
        %v689 = vmul.f32 %v688, %v328
        %v690 = vadd.f32 %v687, %v689
        %v691 = vadd.f32 %v690, 0.0
        %s692 = sld [smem:[#allocation4 + $0xa]]
        %s693 = sld [smem:[#allocation4 + $0x3b]]
        %v694 = vstv %s692
        %v695 = vmul.f32 %v694, %v327
        %v696 = vstv %s693
        %v697 = vmul.f32 %v696, %v328
        %v698 = vadd.f32 %v695, %v697
        %700 = vrot.lane.b32.xlu0 %v698, 112
        %v701 = vpop.permute.xlu0 %700
        %v702 = vrot.slane %v701, 1
        %v703 = vsel %vm340, %v701, %v702
        %v705 = vadd.f32 %v691, %v703
        %s706 = sld [smem:[#allocation4 + $0x11]]
        %s707 = sld [smem:[#allocation4 + $0x42]]
        %v708 = vstv %s706
        %v709 = vmul.f32 %v708, %v327
        %v710 = vstv %s707
        %v711 = vmul.f32 %v710, %v328
        %v712 = vadd.f32 %v709, %v711
        %714 = vrot.lane.b32.xlu0 %v712, 96
        %v715 = vpop.permute.xlu0 %714
        %v716 = vrot.slane %v715, 1
        %v717 = vsel %vm355, %v715, %v716
        %v719 = vadd.f32 %v705, %v717
        %s720 = sld [smem:[#allocation4 + $0x18]]
        %s721 = sld [smem:[#allocation4 + $0x49]]
        %v722 = vstv %s720
        %v723 = vmul.f32 %v722, %v327
        %v724 = vstv %s721
        %v725 = vmul.f32 %v724, %v328
        %v726 = vadd.f32 %v723, %v725
        %728 = vrot.lane.b32.xlu0 %v726, 80
        %v729 = vpop.permute.xlu0 %728
        %v730 = vrot.slane %v729, 1
        %v731 = vsel %vm370, %v729, %v730
        %v733 = vadd.f32 %v719, %v731
        %s734 = sld [smem:[#allocation4 + $0x1f]]
        %s735 = sld [smem:[#allocation4 + $0x50]]
        %v736 = vstv %s734
        %v737 = vmul.f32 %v736, %v327
        %v738 = vstv %s735
        %v739 = vmul.f32 %v738, %v328
        %v740 = vadd.f32 %v737, %v739
        %742 = vrot.lane.b32.xlu0 %v740, 64
        %v743 = vpop.permute.xlu0 %742
        %v744 = vrot.slane %v743, 1
        %v745 = vsel %vm385, %v743, %v744
        %v747 = vadd.f32 %v733, %v745
        %s748 = sld [smem:[#allocation4 + $0x26]]
        %s749 = sld [smem:[#allocation4 + $0x57]]
        %v750 = vstv %s748
        %v751 = vmul.f32 %v750, %v327
        %v752 = vstv %s749
        %v753 = vmul.f32 %v752, %v328
        %v754 = vadd.f32 %v751, %v753
        %756 = vrot.lane.b32.xlu0 %v754, 48
        %v757 = vpop.permute.xlu0 %756
        %v758 = vrot.slane %v757, 1
        %v759 = vsel %vm400, %v757, %v758
        %v761 = vadd.f32 %v747, %v759
        %s762 = sld [smem:[#allocation4 + $0x2d]]
        %s763 = sld [smem:[#allocation4 + $0x5e]]
        %v764 = vstv %s762
        %v765 = vmul.f32 %v764, %v327
        %v766 = vstv %s763
        %v767 = vmul.f32 %v766, %v328
        %v768 = vadd.f32 %v765, %v767
        %770 = vrot.lane.b32.xlu0 %v768, 32
        %v771 = vpop.permute.xlu0 %770
        %v772 = vrot.slane %v771, 1
        %v773 = vsel %vm415, %v771, %v772
        %v775 = vadd.f32 %v761, %v773
        %v777 = vperm.slane %v775, 0
        %v778 = vperm.slane %v775, 1
        %v779 = vperm.slane %v775, 2
        %780 = vrot.lane.b32.xlu0 %v777, 125
        %v781 = vpop.permute.xlu0 %780
        %782 = vrot.lane.b32.xlu0 %v778, 125
        %v783 = vpop.permute.xlu0 %782
        %784 = vrot.lane.b32.xlu0 %v779, 125
        %v785 = vpop.permute.xlu0 %784
        %vm786 = vcmask 1022976
        %v787 = vsel %vm786, %v781, %v783
        %v788 = vsel %vm786, %v783, %v785
        %v791 = vmul.f32 %v682, %v787
        %v792 = vmul.f32 %v683, %v788
        %v793 = vadd.f32 %v672, %v791
        %v794 = vadd.f32 %v673, %v792
        %v795 = vadd.s32 %v303, 1
        %v796 = vadd.s32 %v304, 1
        %vm797 = vcmp.ge.s32.totalorder %v795, 0
        %vm798 = vcmp.ge.s32.totalorder %v796, 0
        %vm799 = vcmp.lt.s32.totalorder %v795, 16
        %vm800 = vcmp.lt.s32.totalorder %v796, 16
        %vm801 = vmand %vm797, %vm799
        %vm802 = vmand %vm798, %vm800
        %v803 = vsel %vm801, 1, 0
        %v804 = vsel %vm802, 1, 0
        %v805 = vcvt.s32.f32 %v803
        %v806 = vcvt.s32.f32 %v804
        %s807 = sld [smem:[#allocation4 + $0x4]]
        %s808 = sld [smem:[#allocation4 + $0x35]]
        %v809 = vstv %s807
        %v810 = vmul.f32 %v809, %v327
        %v811 = vstv %s808
        %v812 = vmul.f32 %v811, %v328
        %v813 = vadd.f32 %v810, %v812
        %v814 = vadd.f32 %v813, 0.0
        %s815 = sld [smem:[#allocation4 + $0xb]]
        %s816 = sld [smem:[#allocation4 + $0x3c]]
        %v817 = vstv %s815
        %v818 = vmul.f32 %v817, %v327
        %v819 = vstv %s816
        %v820 = vmul.f32 %v819, %v328
        %v821 = vadd.f32 %v818, %v820
        %823 = vrot.lane.b32.xlu0 %v821, 112
        %v824 = vpop.permute.xlu0 %823
        %v825 = vrot.slane %v824, 1
        %v826 = vsel %vm340, %v824, %v825
        %v828 = vadd.f32 %v814, %v826
        %s829 = sld [smem:[#allocation4 + $0x12]]
        %s830 = sld [smem:[#allocation4 + $0x43]]
        %v831 = vstv %s829
        %v832 = vmul.f32 %v831, %v327
        %v833 = vstv %s830
        %v834 = vmul.f32 %v833, %v328
        %v835 = vadd.f32 %v832, %v834
        %837 = vrot.lane.b32.xlu0 %v835, 96
        %v838 = vpop.permute.xlu0 %837
        %v839 = vrot.slane %v838, 1
        %v840 = vsel %vm355, %v838, %v839
        %v842 = vadd.f32 %v828, %v840
        %s843 = sld [smem:[#allocation4 + $0x19]]
        %s844 = sld [smem:[#allocation4 + $0x4a]]
        %v845 = vstv %s843
        %v846 = vmul.f32 %v845, %v327
        %v847 = vstv %s844
        %v848 = vmul.f32 %v847, %v328
        %v849 = vadd.f32 %v846, %v848
        %851 = vrot.lane.b32.xlu0 %v849, 80
        %v852 = vpop.permute.xlu0 %851
        %v853 = vrot.slane %v852, 1
        %v854 = vsel %vm370, %v852, %v853
        %v856 = vadd.f32 %v842, %v854
        %s857 = sld [smem:[#allocation4 + $0x20]]
        %s858 = sld [smem:[#allocation4 + $0x51]]
        %v859 = vstv %s857
        %v860 = vmul.f32 %v859, %v327
        %v861 = vstv %s858
        %v862 = vmul.f32 %v861, %v328
        %v863 = vadd.f32 %v860, %v862
        %865 = vrot.lane.b32.xlu0 %v863, 64
        %v866 = vpop.permute.xlu0 %865
        %v867 = vrot.slane %v866, 1
        %v868 = vsel %vm385, %v866, %v867
        %v870 = vadd.f32 %v856, %v868
        %s871 = sld [smem:[#allocation4 + $0x27]]
        %s872 = sld [smem:[#allocation4 + $0x58]]
        %v873 = vstv %s871
        %v874 = vmul.f32 %v873, %v327
        %v875 = vstv %s872
        %v876 = vmul.f32 %v875, %v328
        %v877 = vadd.f32 %v874, %v876
        %879 = vrot.lane.b32.xlu0 %v877, 48
        %v880 = vpop.permute.xlu0 %879
        %v881 = vrot.slane %v880, 1
        %v882 = vsel %vm400, %v880, %v881
        %v884 = vadd.f32 %v870, %v882
        %s885 = sld [smem:[#allocation4 + $0x2e]]
        %s886 = sld [smem:[#allocation4 + $0x5f]]
        %v887 = vstv %s885
        %v888 = vmul.f32 %v887, %v327
        %v889 = vstv %s886
        %v890 = vmul.f32 %v889, %v328
        %v891 = vadd.f32 %v888, %v890
        %893 = vrot.lane.b32.xlu0 %v891, 32
        %v894 = vpop.permute.xlu0 %893
        %v895 = vrot.slane %v894, 1
        %v896 = vsel %vm415, %v894, %v895
        %v898 = vadd.f32 %v884, %v896
        %v900 = vperm.slane %v898, 0
        %v901 = vperm.slane %v898, 1
        %v902 = vperm.slane %v898, 2
        %903 = vrot.lane.b32.xlu0 %v900, 124
        %v904 = vpop.permute.xlu0 %903
        %905 = vrot.lane.b32.xlu0 %v901, 124
        %v906 = vpop.permute.xlu0 %905
        %907 = vrot.lane.b32.xlu0 %v902, 124
        %v908 = vpop.permute.xlu0 %907
        %vm909 = vcmask 1014784
        %v910 = vsel %vm909, %v904, %v906
        %v911 = vsel %vm909, %v906, %v908
        %v914 = vmul.f32 %v805, %v910
        %v915 = vmul.f32 %v806, %v911
        %v916 = vadd.f32 %v793, %v914
        %v917 = vadd.f32 %v794, %v915
        %v918 = vadd.s32 %v303, 2
        %v919 = vadd.s32 %v304, 2
        %vm920 = vcmp.ge.s32.totalorder %v918, 0
        %vm921 = vcmp.ge.s32.totalorder %v919, 0
        %vm922 = vcmp.lt.s32.totalorder %v918, 16
        %vm923 = vcmp.lt.s32.totalorder %v919, 16
        %vm924 = vmand %vm920, %vm922
        %vm925 = vmand %vm921, %vm923
        %v926 = vsel %vm924, 1, 0
        %v927 = vsel %vm925, 1, 0
        %v928 = vcvt.s32.f32 %v926
        %v929 = vcvt.s32.f32 %v927
        %s930 = sld [smem:[#allocation4 + $0x5]]
        %s931 = sld [smem:[#allocation4 + $0x36]]
        %v932 = vstv %s930
        %v933 = vmul.f32 %v932, %v327
        %v934 = vstv %s931
        %v935 = vmul.f32 %v934, %v328
        %v936 = vadd.f32 %v933, %v935
        %v937 = vadd.f32 %v936, 0.0
        %s938 = sld [smem:[#allocation4 + $0xc]]
        %s939 = sld [smem:[#allocation4 + $0x3d]]
        %v940 = vstv %s938
        %v941 = vmul.f32 %v940, %v327
        %v942 = vstv %s939
        %v943 = vmul.f32 %v942, %v328
        %v944 = vadd.f32 %v941, %v943
        %946 = vrot.lane.b32.xlu0 %v944, 112
        %v947 = vpop.permute.xlu0 %946
        %v948 = vrot.slane %v947, 1
        %v949 = vsel %vm340, %v947, %v948
        %v951 = vadd.f32 %v937, %v949
        %s952 = sld [smem:[#allocation4 + $0x13]]
        %s953 = sld [smem:[#allocation4 + $0x44]]
        %v954 = vstv %s952
        %v955 = vmul.f32 %v954, %v327
        %v956 = vstv %s953
        %v957 = vmul.f32 %v956, %v328
        %v958 = vadd.f32 %v955, %v957
        %960 = vrot.lane.b32.xlu0 %v958, 96
        %v961 = vpop.permute.xlu0 %960
        %v962 = vrot.slane %v961, 1
        %v963 = vsel %vm355, %v961, %v962
        %v965 = vadd.f32 %v951, %v963
        %s966 = sld [smem:[#allocation4 + $0x1a]]
        %s967 = sld [smem:[#allocation4 + $0x4b]]
        %v968 = vstv %s966
        %v969 = vmul.f32 %v968, %v327
        %v970 = vstv %s967
        %v971 = vmul.f32 %v970, %v328
        %v972 = vadd.f32 %v969, %v971
        %974 = vrot.lane.b32.xlu0 %v972, 80
        %v975 = vpop.permute.xlu0 %974
        %v976 = vrot.slane %v975, 1
        %v977 = vsel %vm370, %v975, %v976
        %v979 = vadd.f32 %v965, %v977
        %s980 = sld [smem:[#allocation4 + $0x21]]
        %s981 = sld [smem:[#allocation4 + $0x52]]
        %v982 = vstv %s980
        %v983 = vmul.f32 %v982, %v327
        %v984 = vstv %s981
        %v985 = vmul.f32 %v984, %v328
        %v986 = vadd.f32 %v983, %v985
        %988 = vrot.lane.b32.xlu0 %v986, 64
        %v989 = vpop.permute.xlu0 %988
        %v990 = vrot.slane %v989, 1
        %v991 = vsel %vm385, %v989, %v990
        %v993 = vadd.f32 %v979, %v991
        %s994 = sld [smem:[#allocation4 + $0x28]]
        %s995 = sld [smem:[#allocation4 + $0x59]]
        %v996 = vstv %s994
        %v997 = vmul.f32 %v996, %v327
        %v998 = vstv %s995
        %v999 = vmul.f32 %v998, %v328
        %v1000 = vadd.f32 %v997, %v999
        %1002 = vrot.lane.b32.xlu0 %v1000, 48
        %v1003 = vpop.permute.xlu0 %1002
        %v1004 = vrot.slane %v1003, 1
        %v1005 = vsel %vm400, %v1003, %v1004
        %v1007 = vadd.f32 %v993, %v1005
        %s1008 = sld [smem:[#allocation4 + $0x2f]]
        %s1009 = sld [smem:[#allocation4 + $0x60]]
        %v1010 = vstv %s1008
        %v1011 = vmul.f32 %v1010, %v327
        %v1012 = vstv %s1009
        %v1013 = vmul.f32 %v1012, %v328
        %v1014 = vadd.f32 %v1011, %v1013
        %1016 = vrot.lane.b32.xlu0 %v1014, 32
        %v1017 = vpop.permute.xlu0 %1016
        %v1018 = vrot.slane %v1017, 1
        %v1019 = vsel %vm415, %v1017, %v1018
        %v1021 = vadd.f32 %v1007, %v1019
        %v1023 = vperm.slane %v1021, 0
        %v1024 = vperm.slane %v1021, 1
        %v1025 = vperm.slane %v1021, 2
        %1026 = vrot.lane.b32.xlu0 %v1023, 123
        %v1027 = vpop.permute.xlu0 %1026
        %1028 = vrot.lane.b32.xlu0 %v1024, 123
        %v1029 = vpop.permute.xlu0 %1028
        %1030 = vrot.lane.b32.xlu0 %v1025, 123
        %v1031 = vpop.permute.xlu0 %1030
        %vm1032 = vcmask 1006592
        %v1033 = vsel %vm1032, %v1027, %v1029
        %v1034 = vsel %vm1032, %v1029, %v1031
        %v1037 = vmul.f32 %v928, %v1033
        %v1038 = vmul.f32 %v929, %v1034
        %v1039 = vadd.f32 %v916, %v1037
        %v1040 = vadd.f32 %v917, %v1038
        %v1041 = vadd.s32 %v303, 3
        %v1042 = vadd.s32 %v304, 3
        %vm1043 = vcmp.ge.s32.totalorder %v1041, 0
        %vm1044 = vcmp.ge.s32.totalorder %v1042, 0
        %vm1045 = vcmp.lt.s32.totalorder %v1041, 16
        %vm1046 = vcmp.lt.s32.totalorder %v1042, 16
        %vm1047 = vmand %vm1043, %vm1045
        %vm1048 = vmand %vm1044, %vm1046
        %v1049 = vsel %vm1047, 1, 0
        %v1050 = vsel %vm1048, 1, 0
        %v1051 = vcvt.s32.f32 %v1049
        %v1052 = vcvt.s32.f32 %v1050
        %s1053 = sld [smem:[#allocation4 + $0x6]]
        %s1054 = sld [smem:[#allocation4 + $0x37]]
        %v1055 = vstv %s1053
        %v1056 = vmul.f32 %v1055, %v327
        %v1057 = vstv %s1054
        %v1058 = vmul.f32 %v1057, %v328
        %v1059 = vadd.f32 %v1056, %v1058
        %v1060 = vadd.f32 %v1059, 0.0
        %s1061 = sld [smem:[#allocation4 + $0xd]]
        %s1062 = sld [smem:[#allocation4 + $0x3e]]
        %v1063 = vstv %s1061
        %v1064 = vmul.f32 %v1063, %v327
        %v1065 = vstv %s1062
        %v1066 = vmul.f32 %v1065, %v328
        %v1067 = vadd.f32 %v1064, %v1066
        %1069 = vrot.lane.b32.xlu0 %v1067, 112
        %v1070 = vpop.permute.xlu0 %1069
        %v1071 = vrot.slane %v1070, 1
        %v1072 = vsel %vm340, %v1070, %v1071
        %v1074 = vadd.f32 %v1060, %v1072
        %s1075 = sld [smem:[#allocation4 + $0x14]]
        %s1076 = sld [smem:[#allocation4 + $0x45]]
        %v1077 = vstv %s1075
        %v1078 = vmul.f32 %v1077, %v327
        %v1079 = vstv %s1076
        %v1080 = vmul.f32 %v1079, %v328
        %v1081 = vadd.f32 %v1078, %v1080
        %1083 = vrot.lane.b32.xlu0 %v1081, 96
        %v1084 = vpop.permute.xlu0 %1083
        %v1085 = vrot.slane %v1084, 1
        %v1086 = vsel %vm355, %v1084, %v1085
        %v1088 = vadd.f32 %v1074, %v1086
        %s1089 = sld [smem:[#allocation4 + $0x1b]]
        %s1090 = sld [smem:[#allocation4 + $0x4c]]
        %v1091 = vstv %s1089
        %v1092 = vmul.f32 %v1091, %v327
        %v1093 = vstv %s1090
        %v1094 = vmul.f32 %v1093, %v328
        %v1095 = vadd.f32 %v1092, %v1094
        %1097 = vrot.lane.b32.xlu0 %v1095, 80
        %v1098 = vpop.permute.xlu0 %1097
        %v1099 = vrot.slane %v1098, 1
        %v1100 = vsel %vm370, %v1098, %v1099
        %v1102 = vadd.f32 %v1088, %v1100
        %s1103 = sld [smem:[#allocation4 + $0x22]]
        %s1104 = sld [smem:[#allocation4 + $0x53]]
        %v1105 = vstv %s1103
        %v1106 = vmul.f32 %v1105, %v327
        %v1107 = vstv %s1104
        %v1108 = vmul.f32 %v1107, %v328
        %v1109 = vadd.f32 %v1106, %v1108
        %1111 = vrot.lane.b32.xlu0 %v1109, 64
        %v1112 = vpop.permute.xlu0 %1111
        %v1113 = vrot.slane %v1112, 1
        %v1114 = vsel %vm385, %v1112, %v1113
        %v1116 = vadd.f32 %v1102, %v1114
        %s1117 = sld [smem:[#allocation4 + $0x29]]
        %s1118 = sld [smem:[#allocation4 + $0x5a]]
        %v1119 = vstv %s1117
        %v1120 = vmul.f32 %v1119, %v327
        %v1121 = vstv %s1118
        %v1122 = vmul.f32 %v1121, %v328
        %v1123 = vadd.f32 %v1120, %v1122
        %1125 = vrot.lane.b32.xlu0 %v1123, 48
        %v1126 = vpop.permute.xlu0 %1125
        %v1127 = vrot.slane %v1126, 1
        %v1128 = vsel %vm400, %v1126, %v1127
        %v1130 = vadd.f32 %v1116, %v1128
        %s1131 = sld [smem:[#allocation4 + $0x30]]
        %s1132 = sld [smem:[#allocation4 + $0x61]]
        %v1133 = vstv %s1131
        %v1134 = vmul.f32 %v1133, %v327
        %v1135 = vstv %s1132
        %v1136 = vmul.f32 %v1135, %v328
        %v1137 = vadd.f32 %v1134, %v1136
        %1139 = vrot.lane.b32.xlu0 %v1137, 32
        %v1140 = vpop.permute.xlu0 %1139
        %v1141 = vrot.slane %v1140, 1
        %v1142 = vsel %vm415, %v1140, %v1141
        %v1144 = vadd.f32 %v1130, %v1142
        %v1146 = vperm.slane %v1144, 0
        %v1147 = vperm.slane %v1144, 1
        %v1148 = vperm.slane %v1144, 2
        %1149 = vrot.lane.b32.xlu0 %v1146, 122
        %v1150 = vpop.permute.xlu0 %1149
        %1151 = vrot.lane.b32.xlu0 %v1147, 122
        %v1152 = vpop.permute.xlu0 %1151
        %1153 = vrot.lane.b32.xlu0 %v1148, 122
        %v1154 = vpop.permute.xlu0 %1153
        %vm1155 = vcmask 998400
        %v1156 = vsel %vm1155, %v1150, %v1152
        %v1157 = vsel %vm1155, %v1152, %v1154
        %v1160 = vmul.f32 %v1051, %v1156
        %v1161 = vmul.f32 %v1052, %v1157
        %v1162 = vadd.f32 %v1039, %v1160
        %v1163 = vadd.f32 %v1040, %v1161
        %s1164 = sld [smem:[#allocation3]]
        %v1165 = vstv %s1164
        %v1166 = vadd.f32 %v1162, %v1165
        %v1167 = vadd.f32 %v1163, %v1165
        %v1168 = vmax.f32 %v1166, 0.0
        %v1169 = vmax.f32 %v1167, 0.0
        %v1170 = vxor.u32 %v1168, 2147483648
        %v1171 = vxor.u32 %v1169, 2147483648
        %v1172 = vmul.f32 %v1170, 1.442695
        %v1173 = vpow.pop %v1172
        %v1174 = vmul.f32 %v1171, 1.442695
        %v1175 = vpow.pop %v1174
        %v1176 = vadd.f32 %v1173, 1.0
        %v1177 = vadd.f32 %v1175, 1.0
        %v1178 = vrcp.pop %v1176
        %v1179 = vmul.f32 %v1176, %v1178
        %v1180 = vsub.f32 1.0, %v1179
        %v1181 = vmul.f32 %v1178, %v1180
        %v1182 = vadd.f32 %v1178, %v1181
        %vm1183 = vweird.f32 %v1176
        %vm1184 = vweird.f32 %v1178
        %vm1185 = vmor %vm1183, %vm1184
        %v1186 = vsel %vm1185, %v1178, %v1182
        %v1187 = vand.u32 2147483647, %v1176
        %vm1188 = vcmp.eq.f32.partialorder %v1187, 8.507059e+37
        %v1189 = vand.u32 %v1176, 2147483648
        %v1190 = vor.u32 1.1754944e-38, %v1189
        %v1191 = vsel %vm1188, %v1190, %v1186
        %v1192 = vmul.f32 1.0, %v1191
        %v1193 = vrcp.pop %v1177
        %v1194 = vmul.f32 %v1177, %v1193
        %v1195 = vsub.f32 1.0, %v1194
        %v1196 = vmul.f32 %v1193, %v1195
        %v1197 = vadd.f32 %v1193, %v1196
        %vm1198 = vweird.f32 %v1177
        %vm1199 = vweird.f32 %v1193
        %vm1200 = vmor %vm1198, %vm1199
        %v1201 = vsel %vm1200, %v1193, %v1197
        %v1202 = vand.u32 2147483647, %v1177
        %vm1203 = vcmp.eq.f32.partialorder %v1202, 8.507059e+37
        %v1204 = vand.u32 %v1177, 2147483648
        %v1205 = vor.u32 1.1754944e-38, %v1204
        %v1206 = vsel %vm1203, %v1205, %v1201
        %v1207 = vmul.f32 1.0, %v1206
        %v1208 = vld [vmem:[%s179] sm:$0xff]
        %v1209 = vperm.slane %v1192, 0
        %v1210 = vperm.slane %v1207, 0
        %v1213 = vrot.slane %v1210, 4
        %v1214 = vsel %vm215, %v1209, %v1213
        %v1216 = vmul.f32 %v1208, %v1214
        %1217 = vst [vmem:[%s203] sm:$0xff] %v1216
        %s1218 = sand.u32 %s98, 1
        %s1219 = scalar_lea.sflag [#allocation6], %s1218
        %s1220 = sand.u32 %s98, 1
        %s1221 = smul.addr %s1220, 8
        %s1222 = scalar_lea.vmem [#allocation9], %s1221
        // Predicated region
        $region41: #{tpu_custom_call.1} parent=31 // pred_check
          %p1223 = pneg %p108
        $region42: #{tpu_custom_call.1} parent=31 // pred_check_branch
          %1225 = sbr.rel (%p1223) target = $region44
        $region43: #{tpu_custom_call.1} parent=31 // pred_region
          %1227 = vsyncadd %s1219, 0
          %s1228 = smul.addr %s22, 2
          %s1229 = smul.addr %s1228, 4
          %s1230 = scalar_lea.hbm %s3, %s1229
          %s1232 = sshll.u32 %s1222, 4
          %s1233 = int_to_ptr.vmem [resolvable:$true] %s1232
          %s1234 = sshll.u32 %s1230, 4
          %s1235 = int_to_ptr.hbm [resolvable:$true] %s1234
          %1237 = dma.vmem_to_hbm [thread:$0]  %s1233, 128, %s1235, %s1219
        $region44: #{tpu_custom_call.1} parent=31 // pred_fallthru
          _
      $region32: #{tpu_custom_call.1} parent=5 // pred_fallthru
        _
      %p1238 = scmp.le.s32.totalorder 2, %s17
      // Predicated region
      $region45: #{tpu_custom_call.1} parent=5 // pred_check
        %p1239 = pneg %p1238
      $region46: #{tpu_custom_call.1} parent=5 // pred_check_branch
        %1241 = sbr.rel (%p1239) target = $region48
      $region47: #{tpu_custom_call.1} parent=5 // pred_region
        %s1242 = ssub.s32 %s17, 2
        // Predicated region
        $region49: #{tpu_custom_call.1} parent=47 // pred_check
          %p1243 = pneg %p114
        $region50: #{tpu_custom_call.1} parent=47 // pred_check_branch
          %1245 = sbr.rel (%p1243) target = $region52
        $region51: #{tpu_custom_call.1} parent=47 // pred_region
          %s1246 = sand.u32 %s99, 1
          %s1247 = scalar_lea.sflag [#allocation6], %s1246
          %s1248 = sand.u32 %s99, 1
          %s1249 = smul.addr %s1248, 8
          %s1250 = scalar_lea.vmem [#allocation9], %s1249
          %1252 = dma.done %s1247, 128
        $region52: #{tpu_custom_call.1} parent=47 // pred_fallthru
          _
      $region48: #{tpu_custom_call.1} parent=5 // pred_fallthru
        _
    $region6: #{tpu_custom_call.1} parent=1 // loop_footer
      %s21 = sadd.s32 1, %s17
    $region7: #{tpu_custom_call.1} parent=1 // loop_footer_branch
      %16 = sbr.rel target = $region3
    $region8: #{tpu_custom_call.1} parent=1 // loop_exit
      _
    %1253 = vsyncpa [#allocation5], 1
    %s1254 = scalar_lea.sflag [#allocation5], 1
    %1255 = vsyncpa %s1254, 1
    %1256 = vsyncpa [#allocation6], 1
    %s1257 = scalar_lea.sflag [#allocation6], 1
    %1258 = vsyncpa %s1257, 1
    %1259 = vsyncpa [#allocation7], 1
    %s1260 = scalar_lea.sflag [#allocation7], 1
    %1261 = vsyncpa %s1260, 1

</llo_original>
